<compile_context>
chip_gen: v6e
topology: v6e:2x2x1
jax: 0.10.0
libtpu: 0.0.40
codegen_flags: <defaults>
</compile_context>

<pallas_src>
import numpy as np
import jax
import jax.numpy as jnp
from jax.experimental import pallas as pl
from jax.experimental.pallas import tpu as pltpu


# ----------------------------------------------------------------------------
# PIL-exact bicubic weight matrix (deterministic glue)
# ----------------------------------------------------------------------------
def _pil_bicubic_weights(in_size: int, out_size: int) -> np.ndarray:
    """Dense (out_size, in_size) PIL BICUBIC resample weight matrix."""
    a = -0.5

    def cubic(x: float) -> float:
        x = abs(x)
        if x < 1.0:
            return (a + 2.0) * x ** 3 - (a + 3.0) * x ** 2 + 1.0
        if x < 2.0:
            return a * x ** 3 - 5.0 * a * x ** 2 + 8.0 * a * x - 4.0 * a
        return 0.0

    scale = in_size / out_size
    filterscale = max(scale, 1.0)          # PIL antialias: widen kernel when downscaling
    support = 2.0 * filterscale            # bicubic support = 2

    W = np.zeros((out_size, in_size), dtype=np.float64)
    for i in range(out_size):
        center = (i + 0.5) * scale
        xmin = int(center - support + 0.5)
        if xmin < 0:
            xmin = 0
        xmax = int(center + support + 0.5)
        if xmax > in_size:
            xmax = in_size
        taps = [cubic((j + 0.5 - center) / filterscale) for j in range(xmin, xmax)]
        ssum = sum(taps)
        for k, j in enumerate(range(xmin, xmax)):
            W[i, j] = taps[k] / ssum
    return W.astype(np.float32)


# ----------------------------------------------------------------------------
# Pallas kernel: B images per grid step, separable resize+crop as MXU matmuls,
# single lane-dense (size, B*size) output store per step.
# ----------------------------------------------------------------------------
def _resize_crop_kernel(wr_ref, x_ref, wct_ref, o_ref):
    wr = wr_ref[...]          # (size, H)
    wct = wct_ref[...]        # (W, size)
    n_imgs = x_ref.shape[0]   # B (static)

    outs = []
    for b in range(n_imgs):                                    # static unroll
        img = x_ref[b]                                          # (H, W)
        tmp = jnp.dot(wr, img, preferred_element_type=jnp.float32)      # (size, W)
        outs.append(jnp.dot(tmp, wct, preferred_element_type=jnp.float32))  # (size, size)

    # One lane-dense store: (size, B*size) slab, images concatenated along lanes.
    slab = outs[0] if n_imgs == 1 else jnp.concatenate(outs, axis=-1)
    o_ref[0] = slab.astype(o_ref.dtype)


def _pick_batch(nc: int, H: int, W: int, size: int) -> int:
    """Images per grid step: lane-dense output (B*size >= 128, ideally a
    multiple of 128) while keeping double-buffered blocks inside VMEM."""
    lane_target = -(-128 // size)          # smallest B with B*size >= 128
    b = max(8, lane_target)
    # keep 2x (input block + output block) under ~12 MiB (safe on every gen,
    # including v5e's small default scoped VMEM and v7x's 64 MiB physical VMEM)
    per_img_bytes = 2 * (H * W + size * size) * 4
    max_b = max(1, (12 * 2 ** 20) // per_img_bytes)
    return int(max(1, min(b, max_b, nc)))


def pad32_center_crop(x: jax.Array, size: int) -> jax.Array:
    """x: (N, C, H, W) float32  ->  (N, C, size, size) float32."""
    N, C, H, W = x.shape
    scaled = size + 32

    # Bicubic resize weights for rows / cols, crop fused by keeping only the
    # needed output rows/cols (crop offset = 16 for even sizes).
    top = int(round((scaled - size) / 2.0))
    left = int(round((scaled - size) / 2.0))
    wr_full = _pil_bicubic_weights(H, scaled)    # (scaled, H)
    wc_full = _pil_bicubic_weights(W, scaled)    # (scaled, W)
    wr = jnp.asarray(wr_full[top:top + size])            # (size, H)
    wct = jnp.asarray(wc_full[left:left + size].T)       # (W, size)

    nc = N * C
    B = _pick_batch(nc, H, W, size)
    G = -(-nc // B)                                       # grid length

    xr = x.reshape(nc, H, W)
    pad = G * B - nc
    if pad:
        xr = jnp.concatenate([xr, jnp.zeros((pad, H, W), x.dtype)], axis=0)

    # Advisory cost estimate (whole call).
    flops = 2 * G * B * size * W * (H + size)
    bytes_accessed = 4 * (G * B * H * W + G * size * B * size + size * H + W * size)

    # Explicit VMEM budget (double-buffered blocks + weights), with headroom.
    vmem_needed = 2 * 4 * (B * H * W + size * B * size + size * H + W * size)
    vmem_limit = int(min(100 * 2 ** 20, max(32 * 2 ** 20, 2 * vmem_needed)))

    out = pl.pallas_call(
        _resize_crop_kernel,
        out_shape=jax.ShapeDtypeStruct((G, size, B * size), x.dtype),
        grid_spec=pltpu.PrefetchScalarGridSpec(
            num_scalar_prefetch=0,
            grid=(G,),
            in_specs=[
                pl.BlockSpec((size, H), lambda i: (0, 0)),        # Wr   (grid-invariant)
                pl.BlockSpec((B, H, W), lambda i: (i, 0, 0)),     # B images per step
                pl.BlockSpec((W, size), lambda i: (0, 0)),        # Wc^T (grid-invariant)
            ],
            out_specs=pl.BlockSpec((1, size, B * size), lambda i: (i, 0, 0)),
        ),
        compiler_params=pltpu.CompilerParams(
            dimension_semantics=("parallel",),
            vmem_limit_bytes=vmem_limit),
        cost_estimate=pl.CostEstimate(
            flops=flops, transcendentals=0, bytes_accessed=bytes_accessed),
    )(wr, xr, wct)

    # Undo lane packing: (G, size, B*size) -> (G*B, size, size) -> (N, C, size, size)
    out = out.reshape(G, size, B, size).transpose(0, 2, 1, 3).reshape(G * B, size, size)
    return out[:nc].reshape(N, C, size, size)


if __name__ == "__main__":
    size = 16                                   # Pad32CenterCrop(size=16)
    key = jax.random.PRNGKey(0)
    x = jax.random.uniform(key, (2, 4, 16, 16), dtype=jnp.float32)

    y = pad32_center_crop(x, size)
    jax.block_until_ready(y)

    assert y.shape == (2, 4, size, size), y.shape
    assert y.dtype == jnp.float32

    # Pure-JAX reference of the same separable resize+crop math.
    wr_np = _pil_bicubic_weights(16, size + 32)[16:16 + size]
    wc_np = _pil_bicubic_weights(16, size + 32)[16:16 + size]
    ref = jnp.einsum('sh,nchw,tw->ncst', jnp.asarray(wr_np), x, jnp.asarray(wc_np))
    assert float(jnp.max(jnp.abs(y - ref))) < 1e-2

    print("KERNEL_OK")
</pallas_src>

<mosaic_0001>
module attributes {stable_mosaic.version = 11 : i64} {
  func.func @_resize_crop_kernel(%arg0: i32, %arg1: memref<16x16xf32, #tpu.memory_space<vmem>>, %arg2: memref<8x16x16xf32, #tpu.memory_space<vmem>>, %arg3: memref<16x16xf32, #tpu.memory_space<vmem>>, %arg4: memref<1x16x128xf32, #tpu.memory_space<vmem>>) attributes {dimension_semantics = [#tpu.dimension_semantics<parallel>], iteration_bounds = array<i64: 1>, scalar_prefetch = 0 : i64, scratch_operands = 0 : i64, tpu.core_type = #tpu.core_type<tc>, window_params = [{pipeline_mode = #tpu.pipeline_mode<synchronous>, transform_indices = @transform_0, window_bounds = array<i64: 16, 16>}, {transform_indices = @transform_1, window_bounds = array<i64: 8, 16, 16>}, {pipeline_mode = #tpu.pipeline_mode<synchronous>, transform_indices = @transform_2, window_bounds = array<i64: 16, 16>}, {transform_indices = @transform_3, window_bounds = array<i64: 1, 16, 128>}]} {
    %c0 = arith.constant 0 : index
    %c0_0 = arith.constant 0 : index
    %0 = vector.load %arg1[%c0, %c0_0] : memref<16x16xf32, #tpu.memory_space<vmem>>, vector<16x16xf32>
    %c0_1 = arith.constant 0 : index
    %c0_2 = arith.constant 0 : index
    %1 = vector.load %arg3[%c0_1, %c0_2] : memref<16x16xf32, #tpu.memory_space<vmem>>, vector<16x16xf32>
    %c0_3 = arith.constant 0 : index
    %c0_4 = arith.constant 0 : index
    %c0_5 = arith.constant 0 : index
    %2 = vector.load %arg2[%c0_3, %c0_4, %c0_5] : memref<8x16x16xf32, #tpu.memory_space<vmem>>, vector<1x16x16xf32>
    %3 = vector.shape_cast %2 : vector<1x16x16xf32> to vector<16x16xf32>
    %cst = arith.constant dense<0.000000e+00> : vector<16x16xf32>
    %4 = tpu.matmul %0, %3, %cst {dimension_numbers = #tpu.dot_dimension_numbers<[1], [0], [0], [1], [0, 0, 1, 1], [], []>} : vector<16x16xf32>, vector<16x16xf32>, vector<16x16xf32> -> vector<16x16xf32>
    %cst_6 = arith.constant dense<0.000000e+00> : vector<16x16xf32>
    %5 = tpu.matmul %4, %1, %cst_6 {dimension_numbers = #tpu.dot_dimension_numbers<[1], [0], [0], [1], [0, 0, 1, 1], [], []>} : vector<16x16xf32>, vector<16x16xf32>, vector<16x16xf32> -> vector<16x16xf32>
    %c1 = arith.constant 1 : index
    %c0_7 = arith.constant 0 : index
    %c0_8 = arith.constant 0 : index
    %6 = vector.load %arg2[%c1, %c0_7, %c0_8] : memref<8x16x16xf32, #tpu.memory_space<vmem>>, vector<1x16x16xf32>
    %7 = vector.shape_cast %6 : vector<1x16x16xf32> to vector<16x16xf32>
    %cst_9 = arith.constant dense<0.000000e+00> : vector<16x16xf32>
    %8 = tpu.matmul %0, %7, %cst_9 {dimension_numbers = #tpu.dot_dimension_numbers<[1], [0], [0], [1], [0, 0, 1, 1], [], []>} : vector<16x16xf32>, vector<16x16xf32>, vector<16x16xf32> -> vector<16x16xf32>
    %cst_10 = arith.constant dense<0.000000e+00> : vector<16x16xf32>
    %9 = tpu.matmul %8, %1, %cst_10 {dimension_numbers = #tpu.dot_dimension_numbers<[1], [0], [0], [1], [0, 0, 1, 1], [], []>} : vector<16x16xf32>, vector<16x16xf32>, vector<16x16xf32> -> vector<16x16xf32>
    %c2 = arith.constant 2 : index
    %c0_11 = arith.constant 0 : index
    %c0_12 = arith.constant 0 : index
    %10 = vector.load %arg2[%c2, %c0_11, %c0_12] : memref<8x16x16xf32, #tpu.memory_space<vmem>>, vector<1x16x16xf32>
    %11 = vector.shape_cast %10 : vector<1x16x16xf32> to vector<16x16xf32>
    %cst_13 = arith.constant dense<0.000000e+00> : vector<16x16xf32>
    %12 = tpu.matmul %0, %11, %cst_13 {dimension_numbers = #tpu.dot_dimension_numbers<[1], [0], [0], [1], [0, 0, 1, 1], [], []>} : vector<16x16xf32>, vector<16x16xf32>, vector<16x16xf32> -> vector<16x16xf32>
    %cst_14 = arith.constant dense<0.000000e+00> : vector<16x16xf32>
    %13 = tpu.matmul %12, %1, %cst_14 {dimension_numbers = #tpu.dot_dimension_numbers<[1], [0], [0], [1], [0, 0, 1, 1], [], []>} : vector<16x16xf32>, vector<16x16xf32>, vector<16x16xf32> -> vector<16x16xf32>
    %c3 = arith.constant 3 : index
    %c0_15 = arith.constant 0 : index
    %c0_16 = arith.constant 0 : index
    %14 = vector.load %arg2[%c3, %c0_15, %c0_16] : memref<8x16x16xf32, #tpu.memory_space<vmem>>, vector<1x16x16xf32>
    %15 = vector.shape_cast %14 : vector<1x16x16xf32> to vector<16x16xf32>
    %cst_17 = arith.constant dense<0.000000e+00> : vector<16x16xf32>
    %16 = tpu.matmul %0, %15, %cst_17 {dimension_numbers = #tpu.dot_dimension_numbers<[1], [0], [0], [1], [0, 0, 1, 1], [], []>} : vector<16x16xf32>, vector<16x16xf32>, vector<16x16xf32> -> vector<16x16xf32>
    %cst_18 = arith.constant dense<0.000000e+00> : vector<16x16xf32>
    %17 = tpu.matmul %16, %1, %cst_18 {dimension_numbers = #tpu.dot_dimension_numbers<[1], [0], [0], [1], [0, 0, 1, 1], [], []>} : vector<16x16xf32>, vector<16x16xf32>, vector<16x16xf32> -> vector<16x16xf32>
    %c4 = arith.constant 4 : index
    %c0_19 = arith.constant 0 : index
    %c0_20 = arith.constant 0 : index
    %18 = vector.load %arg2[%c4, %c0_19, %c0_20] : memref<8x16x16xf32, #tpu.memory_space<vmem>>, vector<1x16x16xf32>
    %19 = vector.shape_cast %18 : vector<1x16x16xf32> to vector<16x16xf32>
    %cst_21 = arith.constant dense<0.000000e+00> : vector<16x16xf32>
    %20 = tpu.matmul %0, %19, %cst_21 {dimension_numbers = #tpu.dot_dimension_numbers<[1], [0], [0], [1], [0, 0, 1, 1], [], []>} : vector<16x16xf32>, vector<16x16xf32>, vector<16x16xf32> -> vector<16x16xf32>
    %cst_22 = arith.constant dense<0.000000e+00> : vector<16x16xf32>
    %21 = tpu.matmul %20, %1, %cst_22 {dimension_numbers = #tpu.dot_dimension_numbers<[1], [0], [0], [1], [0, 0, 1, 1], [], []>} : vector<16x16xf32>, vector<16x16xf32>, vector<16x16xf32> -> vector<16x16xf32>
    %c5 = arith.constant 5 : index
    %c0_23 = arith.constant 0 : index
    %c0_24 = arith.constant 0 : index
    %22 = vector.load %arg2[%c5, %c0_23, %c0_24] : memref<8x16x16xf32, #tpu.memory_space<vmem>>, vector<1x16x16xf32>
    %23 = vector.shape_cast %22 : vector<1x16x16xf32> to vector<16x16xf32>
    %cst_25 = arith.constant dense<0.000000e+00> : vector<16x16xf32>
    %24 = tpu.matmul %0, %23, %cst_25 {dimension_numbers = #tpu.dot_dimension_numbers<[1], [0], [0], [1], [0, 0, 1, 1], [], []>} : vector<16x16xf32>, vector<16x16xf32>, vector<16x16xf32> -> vector<16x16xf32>
    %cst_26 = arith.constant dense<0.000000e+00> : vector<16x16xf32>
    %25 = tpu.matmul %24, %1, %cst_26 {dimension_numbers = #tpu.dot_dimension_numbers<[1], [0], [0], [1], [0, 0, 1, 1], [], []>} : vector<16x16xf32>, vector<16x16xf32>, vector<16x16xf32> -> vector<16x16xf32>
    %c6 = arith.constant 6 : index
    %c0_27 = arith.constant 0 : index
    %c0_28 = arith.constant 0 : index
    %26 = vector.load %arg2[%c6, %c0_27, %c0_28] : memref<8x16x16xf32, #tpu.memory_space<vmem>>, vector<1x16x16xf32>
    %27 = vector.shape_cast %26 : vector<1x16x16xf32> to vector<16x16xf32>
    %cst_29 = arith.constant dense<0.000000e+00> : vector<16x16xf32>
    %28 = tpu.matmul %0, %27, %cst_29 {dimension_numbers = #tpu.dot_dimension_numbers<[1], [0], [0], [1], [0, 0, 1, 1], [], []>} : vector<16x16xf32>, vector<16x16xf32>, vector<16x16xf32> -> vector<16x16xf32>
    %cst_30 = arith.constant dense<0.000000e+00> : vector<16x16xf32>
    %29 = tpu.matmul %28, %1, %cst_30 {dimension_numbers = #tpu.dot_dimension_numbers<[1], [0], [0], [1], [0, 0, 1, 1], [], []>} : vector<16x16xf32>, vector<16x16xf32>, vector<16x16xf32> -> vector<16x16xf32>
    %c7 = arith.constant 7 : index
    %c0_31 = arith.constant 0 : index
    %c0_32 = arith.constant 0 : index
    %30 = vector.load %arg2[%c7, %c0_31, %c0_32] : memref<8x16x16xf32, #tpu.memory_space<vmem>>, vector<1x16x16xf32>
    %31 = vector.shape_cast %30 : vector<1x16x16xf32> to vector<16x16xf32>
    %cst_33 = arith.constant dense<0.000000e+00> : vector<16x16xf32>
    %32 = tpu.matmul %0, %31, %cst_33 {dimension_numbers = #tpu.dot_dimension_numbers<[1], [0], [0], [1], [0, 0, 1, 1], [], []>} : vector<16x16xf32>, vector<16x16xf32>, vector<16x16xf32> -> vector<16x16xf32>
    %cst_34 = arith.constant dense<0.000000e+00> : vector<16x16xf32>
    %33 = tpu.matmul %32, %1, %cst_34 {dimension_numbers = #tpu.dot_dimension_numbers<[1], [0], [0], [1], [0, 0, 1, 1], [], []>} : vector<16x16xf32>, vector<16x16xf32>, vector<16x16xf32> -> vector<16x16xf32>
    %34 = tpu.concatenate %5, %9, %13, %17, %21, %25, %29, %33 in 1 : vector<16x16xf32>, vector<16x16xf32>, vector<16x16xf32>, vector<16x16xf32>, vector<16x16xf32>, vector<16x16xf32>, vector<16x16xf32>, vector<16x16xf32> -> vector<16x128xf32>
    %c0_35 = arith.constant 0 : index
    %c0_36 = arith.constant 0 : index
    %c0_37 = arith.constant 0 : index
    %35 = vector.load %arg4[%c0_35, %c0_36, %c0_37] : memref<1x16x128xf32, #tpu.memory_space<vmem>>, vector<1x16x128xf32>
    %36 = vector.shape_cast %35 : vector<1x16x128xf32> to vector<16x128xf32>
    %37 = vector.shape_cast %34 : vector<16x128xf32> to vector<1x16x128xf32>
    tpu.vector_store %arg4[%c0_35, %c0_36, %c0_37], %37 {strides = array<i32>} : memref<1x16x128xf32, #tpu.memory_space<vmem>>, vector<1x16x128xf32>,
    return
  }
  func.func @transform_0(%arg0: i32) -> (i32, i32) {
    %c0_i32 = arith.constant 0 : i32
    %c0_i32_0 = arith.constant 0 : i32
    %c0_i32_1 = arith.constant 0 : i32
    return %c0_i32, %c0_i32_0 : i32, i32
  }
  func.func @transform_1(%arg0: i32) -> (i32, i32, i32) {
    %c0_i32 = arith.constant 0 : i32
    %c0_i32_0 = arith.constant 0 : i32
    %c0_i32_1 = arith.constant 0 : i32
    return %arg0, %c0_i32, %c0_i32_0 : i32, i32, i32
  }
  func.func @transform_2(%arg0: i32) -> (i32, i32) {
    %c0_i32 = arith.constant 0 : i32
    %c0_i32_0 = arith.constant 0 : i32
    %c0_i32_1 = arith.constant 0 : i32
    return %c0_i32, %c0_i32_0 : i32, i32
  }
  func.func @transform_3(%arg0: i32) -> (i32, i32, i32) {
    %c0_i32 = arith.constant 0 : i32
    %c0_i32_0 = arith.constant 0 : i32
    %c0_i32_1 = arith.constant 0 : i32
    return %arg0, %c0_i32, %c0_i32_0 : i32, i32, i32
  }
}

</mosaic_0001>

<llo_original>
// kernel: tpu_custom_call.1
$region0: #{tpu_custom_call.1}
  #allocation0 [shape = 'u32[]', space=smem, size = 0x4, offset = 0x4, fixed_abs, tag = 'smem constant byte address 0x4 - core index']
  #allocation1 [shape = 'u32[144,128]{1,0:T(1,128)}', space=vmem, size = 0x12000, scoped, tag = 'internal scratch']
  %s0 = inlined_call_operand.hbm [shape: f32[16,16], index: 0, kind: input, shape index: {}]
  %s1 = inlined_call_operand.hbm [shape: f32[8,16,16], index: 1, kind: input, shape index: {}]
  %s2 = inlined_call_operand.hbm [shape: f32[16,16], index: 2, kind: input, shape index: {}]
  %s3 = inlined_call_operand.hbm [shape: f32[1,16,128], index: 3, kind: output, shape index: {}]
  %s4 = sld [smem:[#allocation0]]
  $region34: #{tpu_custom_call.1} parent=0
    _
  %s6 = ssub.s32 1, %s4
  %s7 = scalar_select 0, %s6, %s4
  $region1: #{tpu_custom_call.1} parent=0
    #allocation2 [shape = 'u8[8192]{0}', space=vmem, size = 0x2000, scoped, tag = 'input window, operand 0, single buffered']
    #allocation3 [shape = 's32[1]{0}', space=sflag, size = 0x4, scoped, tag = 'scoped memory for tpu_custom_call.1']
    #allocation4 [shape = 's32[1]{0}', space=sflag, size = 0x4, scoped, tag = 'scoped memory for tpu_custom_call.1']
    #allocation5 [shape = 'u8[65536]{0}', space=vmem, size = 0x10000, scoped, tag = 'input window, operand 1, single buffered']
    #allocation6 [shape = 's32[1]{0}', space=sflag, size = 0x4, scoped, tag = 'scoped memory for tpu_custom_call.1']
    #allocation7 [shape = 'u8[8192]{0}', space=vmem, size = 0x2000, scoped, tag = 'input window, operand 2, single buffered']
    #allocation8 [shape = 'u8[8192]{0}', space=vmem, size = 0x2000, scoped, tag = 'output window, operand 0, single buffered']
    %8 = vsyncpa [#allocation3], 0
    %9 = vsyncpa [#allocation6], 0
    %10 = vsyncpa [#allocation4], 0
    // Predicated region
    $region2: #{tpu_custom_call.1} parent=1 // pred_check
      _
    $region3: #{tpu_custom_call.1} parent=1 // pred_check_branch
      %12 = sbr.rel (0) target = $region5
    $region4: #{tpu_custom_call.1} parent=1 // pred_region
      %s14 = ssub.s32 256, 256
      %15 = vsyncadd [#allocation3], %s14
      %s16 = sshll.u32 [#allocation2], 4
      %s17 = int_to_ptr.vmem [resolvable:$true] %s16
      %22 = dma.hbm_to_vmem [thread:$0]  %s0, 256, %s17, [#allocation3], 128, 128, 8
    $region5: #{tpu_custom_call.1} parent=1 // pred_fallthru
      _
    // Predicated region
    $region6: #{tpu_custom_call.1} parent=1 // pred_check
      _
    $region7: #{tpu_custom_call.1} parent=1 // pred_check_branch
      %24 = sbr.rel (0) target = $region9
    $region8: #{tpu_custom_call.1} parent=1 // pred_region
      %s26 = ssub.s32 2048, 2048
      %27 = vsyncadd [#allocation6], %s26
      %s28 = sshll.u32 [#allocation5], 4
      %s29 = int_to_ptr.vmem [resolvable:$true] %s28
      %34 = dma.hbm_to_vmem [thread:$0]  %s1, 2048, %s29, [#allocation6], 128, 128, 8
    $region9: #{tpu_custom_call.1} parent=1 // pred_fallthru
      _
    // Predicated region
    $region10: #{tpu_custom_call.1} parent=1 // pred_check
      _
    $region11: #{tpu_custom_call.1} parent=1 // pred_check_branch
      %36 = sbr.rel (0) target = $region13
    $region12: #{tpu_custom_call.1} parent=1 // pred_region
      %s38 = ssub.s32 256, 256
      %39 = vsyncadd [#allocation6], %s38
      %s40 = sshll.u32 [#allocation7], 4
      %s41 = int_to_ptr.vmem [resolvable:$true] %s40
      %46 = dma.hbm_to_vmem [thread:$0]  %s2, 256, %s41, [#allocation6], 128, 128, 8
    $region13: #{tpu_custom_call.1} parent=1 // pred_fallthru
      _
    // Predicated region
    $region14: #{tpu_custom_call.1} parent=1 // pred_check
      _
    $region15: #{tpu_custom_call.1} parent=1 // pred_check_branch
      %48 = sbr.rel (0) target = $region17
    $region16: #{tpu_custom_call.1} parent=1 // pred_region
      %49 = dma.done [#allocation3], 256
    $region17: #{tpu_custom_call.1} parent=1 // pred_fallthru
      _
    // Predicated region
    $region18: #{tpu_custom_call.1} parent=1 // pred_check
      _
    $region19: #{tpu_custom_call.1} parent=1 // pred_check_branch
      %51 = sbr.rel (0) target = $region21
    $region20: #{tpu_custom_call.1} parent=1 // pred_region
      %52 = dma.done [#allocation6], 2048
    $region21: #{tpu_custom_call.1} parent=1 // pred_fallthru
      _
    // Predicated region
    $region22: #{tpu_custom_call.1} parent=1 // pred_check
      _
    $region23: #{tpu_custom_call.1} parent=1 // pred_check_branch
      %54 = sbr.rel (0) target = $region25
    $region24: #{tpu_custom_call.1} parent=1 // pred_region
      %55 = dma.done [#allocation6], 256
    $region25: #{tpu_custom_call.1} parent=1 // pred_fallthru
      _
    %v56 = vld [vmem:[#allocation2] sm:$0xff]
    %v57 = vld [vmem:[#allocation2 + $0x8] sm:$0xff]
    %v58 = vld [vmem:[#allocation7] sm:$0xff]
    %v59 = vld [vmem:[#allocation7 + $0x8] sm:$0xff]
    %v60 = vld [vmem:[#allocation5] sm:$0xff]
    %v61 = vld [vmem:[#allocation5 + $0x8] sm:$0xff]
    %vm62 = vcmask 130048
    %v64 = vsel %vm62, %v56, 0
    %v67 = vsel %vm62, %v57, 0
    %69 = vmatprep.subr.mxu0 0.0
    %70 = vmatpush1.msra.mxu0 0.0
    %71 = vmatprep.subr.mxu0 0.0
    %72 = vmatpush1.msra.mxu0 0.0
    %73 = vmatprep.subr.mxu0 0.0
    %74 = vmatpush1.msra.mxu0 0.0
    %75 = vmatprep.subr.mxu0 0.0
    %76 = vmatpush1.msra.mxu0 0.0
    %77 = vmatprep.subr.mxu0 0.0
    %78 = vmatpush1.msra.mxu0 0.0
    %79 = vmatprep.subr.mxu0 0.0
    %80 = vmatpush1.msra.mxu0 0.0
    %81 = vmatprep.subr.mxu0 0.0
    %82 = vmatpush1.msra.mxu0 0.0
    %83 = vmatprep.subr.mxu0 0.0
    %84 = vmatpush1.msra.mxu0 0.0
    %85 = vmatprep.subr.mxu0 0.0
    %86 = vmatpush1.msra.mxu0 0.0
    %87 = vmatprep.subr.mxu0 0.0
    %88 = vmatpush1.msra.mxu0 0.0
    %89 = vmatprep.subr.mxu0 0.0
    %90 = vmatpush1.msra.mxu0 0.0
    %91 = vmatprep.subr.mxu0 0.0
    %92 = vmatpush1.msra.mxu0 0.0
    %93 = vmatprep.subr.mxu0 0.0
    %94 = vmatpush1.msra.mxu0 0.0
    %95 = vmatprep.subr.mxu0 0.0
    %96 = vmatpush1.msra.mxu0 0.0
    %97 = vmatprep.subr.mxu0 0.0
    %98 = vmatpush1.msra.mxu0 %v61
    %99 = vmatprep.subr.mxu0 0.0
    %100 = vmatpush1.msra.mxu0 %v60
    %101 = vmatprep.subr.mxu0 0.0
    %102 = vmatpush2.msra.mxu0 0.0
    %103 = vmatprep.subr.mxu0 0.0
    %104 = vmatpush2.msra.mxu0 0.0
    %105 = vmatprep.subr.mxu0 0.0
    %106 = vmatpush2.msra.mxu0 0.0
    %107 = vmatprep.subr.mxu0 0.0
    %108 = vmatpush2.msra.mxu0 0.0
    %109 = vmatprep.subr.mxu0 0.0
    %110 = vmatpush2.msra.mxu0 0.0
    %111 = vmatprep.subr.mxu0 0.0
    %112 = vmatpush2.msra.mxu0 0.0
    %113 = vmatprep.subr.mxu0 0.0
    %114 = vmatpush2.msra.mxu0 0.0
    %115 = vmatprep.subr.mxu0 0.0
    %116 = vmatpush2.msra.mxu0 0.0
    %117 = vmatprep.subr.mxu0 0.0
    %118 = vmatpush2.msra.mxu0 0.0
    %119 = vmatprep.subr.mxu0 0.0
    %120 = vmatpush2.msra.mxu0 0.0
    %121 = vmatprep.subr.mxu0 0.0
    %122 = vmatpush2.msra.mxu0 0.0
    %123 = vmatprep.subr.mxu0 0.0
    %124 = vmatpush2.msra.mxu0 0.0
    %125 = vmatprep.subr.mxu0 0.0
    %126 = vmatpush2.msra.mxu0 0.0
    %127 = vmatprep.subr.mxu0 0.0
    %128 = vmatpush2.msra.mxu0 0.0
    %129 = vmatprep.subr.mxu0 0.0
    %130 = vmatpush2.msra.mxu0 0.0
    %131 = vmatprep.subr.mxu0 0.0
    %132 = vmatpush2.msra.mxu0 0.0
    %133 = vmatprep.mubr.f32.mxu0 0.0
    %134 = vmatmul.mubr.f32.gmra.mxu0 %v64
    %v135 = vpop.f32.mrf.mxu0
    %v136 = vadd.f32 0.0, %v135
    %v137 = vpop.f32.mrf.mxu0
    %138 = vmatprep.mubr.f32.mxu0 0.0
    %139 = vmatmul.mubr.f32.gmra.mxu0 %v67
    %v140 = vpop.f32.mrf.mxu0
    %v141 = vadd.f32 0.0, %v140
    %v142 = vpop.f32.mrf.mxu0
    %143 = vdwg.mxu0
    %v145 = vsel %vm62, %v136, 0
    %v148 = vsel %vm62, %v141, 0
    %150 = vmatprep.subr.mxu0 0.0
    %151 = vmatpush1.msra.mxu0 0.0
    %152 = vmatprep.subr.mxu0 0.0
    %153 = vmatpush1.msra.mxu0 0.0
    %154 = vmatprep.subr.mxu0 0.0
    %155 = vmatpush1.msra.mxu0 0.0
    %156 = vmatprep.subr.mxu0 0.0
    %157 = vmatpush1.msra.mxu0 0.0
    %158 = vmatprep.subr.mxu0 0.0
    %159 = vmatpush1.msra.mxu0 0.0
    %160 = vmatprep.subr.mxu0 0.0
    %161 = vmatpush1.msra.mxu0 0.0
    %162 = vmatprep.subr.mxu0 0.0
    %163 = vmatpush1.msra.mxu0 0.0
    %164 = vmatprep.subr.mxu0 0.0
    %165 = vmatpush1.msra.mxu0 0.0
    %166 = vmatprep.subr.mxu0 0.0
    %167 = vmatpush1.msra.mxu0 0.0
    %168 = vmatprep.subr.mxu0 0.0
    %169 = vmatpush1.msra.mxu0 0.0
    %170 = vmatprep.subr.mxu0 0.0
    %171 = vmatpush1.msra.mxu0 0.0
    %172 = vmatprep.subr.mxu0 0.0
    %173 = vmatpush1.msra.mxu0 0.0
    %174 = vmatprep.subr.mxu0 0.0
    %175 = vmatpush1.msra.mxu0 0.0
    %176 = vmatprep.subr.mxu0 0.0
    %177 = vmatpush1.msra.mxu0 0.0
    %178 = vmatprep.subr.mxu0 0.0
    %179 = vmatpush1.msra.mxu0 %v59
    %180 = vmatprep.subr.mxu0 0.0
    %181 = vmatpush1.msra.mxu0 %v58
    %182 = vmatprep.subr.mxu0 0.0
    %183 = vmatpush2.msra.mxu0 0.0
    %184 = vmatprep.subr.mxu0 0.0
    %185 = vmatpush2.msra.mxu0 0.0
    %186 = vmatprep.subr.mxu0 0.0
    %187 = vmatpush2.msra.mxu0 0.0
    %188 = vmatprep.subr.mxu0 0.0
    %189 = vmatpush2.msra.mxu0 0.0
    %190 = vmatprep.subr.mxu0 0.0
    %191 = vmatpush2.msra.mxu0 0.0
    %192 = vmatprep.subr.mxu0 0.0
    %193 = vmatpush2.msra.mxu0 0.0
    %194 = vmatprep.subr.mxu0 0.0
    %195 = vmatpush2.msra.mxu0 0.0
    %196 = vmatprep.subr.mxu0 0.0
    %197 = vmatpush2.msra.mxu0 0.0
    %198 = vmatprep.subr.mxu0 0.0
    %199 = vmatpush2.msra.mxu0 0.0
    %200 = vmatprep.subr.mxu0 0.0
    %201 = vmatpush2.msra.mxu0 0.0
    %202 = vmatprep.subr.mxu0 0.0
    %203 = vmatpush2.msra.mxu0 0.0
    %204 = vmatprep.subr.mxu0 0.0
    %205 = vmatpush2.msra.mxu0 0.0
    %206 = vmatprep.subr.mxu0 0.0
    %207 = vmatpush2.msra.mxu0 0.0
    %208 = vmatprep.subr.mxu0 0.0
    %209 = vmatpush2.msra.mxu0 0.0
    %210 = vmatprep.subr.mxu0 0.0
    %211 = vmatpush2.msra.mxu0 0.0
    %212 = vmatprep.subr.mxu0 0.0
    %213 = vmatpush2.msra.mxu0 0.0
    %214 = vmatprep.mubr.f32.mxu0 0.0
    %215 = vmatmul.mubr.f32.gmra.mxu0 %v145
    %v216 = vpop.f32.mrf.mxu0
    %v217 = vadd.f32 0.0, %v216
    %v218 = vpop.f32.mrf.mxu0
    %219 = vmatprep.mubr.f32.mxu0 0.0
    %220 = vmatmul.mubr.f32.gmra.mxu0 %v148
    %v221 = vpop.f32.mrf.mxu0
    %v222 = vadd.f32 0.0, %v221
    %v223 = vpop.f32.mrf.mxu0
    %224 = vdwg.mxu0
    %s225 = scalar_lea.vmem [#allocation5], 16
    %v226 = vld [vmem:[%s225] sm:$0xff]
    %v227 = vld [vmem:[%s225 + $0x8] sm:$0xff]
    %228 = vmatprep.subr.mxu0 0.0
    %229 = vmatpush1.msra.mxu0 0.0
    %230 = vmatprep.subr.mxu0 0.0
    %231 = vmatpush1.msra.mxu0 0.0
    %232 = vmatprep.subr.mxu0 0.0
    %233 = vmatpush1.msra.mxu0 0.0
    %234 = vmatprep.subr.mxu0 0.0
    %235 = vmatpush1.msra.mxu0 0.0
    %236 = vmatprep.subr.mxu0 0.0
    %237 = vmatpush1.msra.mxu0 0.0
    %238 = vmatprep.subr.mxu0 0.0
    %239 = vmatpush1.msra.mxu0 0.0
    %240 = vmatprep.subr.mxu0 0.0
    %241 = vmatpush1.msra.mxu0 0.0
    %242 = vmatprep.subr.mxu0 0.0
    %243 = vmatpush1.msra.mxu0 0.0
    %244 = vmatprep.subr.mxu0 0.0
    %245 = vmatpush1.msra.mxu0 0.0
    %246 = vmatprep.subr.mxu0 0.0
    %247 = vmatpush1.msra.mxu0 0.0
    %248 = vmatprep.subr.mxu0 0.0
    %249 = vmatpush1.msra.mxu0 0.0
    %250 = vmatprep.subr.mxu0 0.0
    %251 = vmatpush1.msra.mxu0 0.0
    %252 = vmatprep.subr.mxu0 0.0
    %253 = vmatpush1.msra.mxu0 0.0
    %254 = vmatprep.subr.mxu0 0.0
    %255 = vmatpush1.msra.mxu0 0.0
    %256 = vmatprep.subr.mxu0 0.0
    %257 = vmatpush1.msra.mxu0 %v227
    %258 = vmatprep.subr.mxu0 0.0
    %259 = vmatpush1.msra.mxu0 %v226
    %260 = vmatprep.subr.mxu0 0.0
    %261 = vmatpush2.msra.mxu0 0.0
    %262 = vmatprep.subr.mxu0 0.0
    %263 = vmatpush2.msra.mxu0 0.0
    %264 = vmatprep.subr.mxu0 0.0
    %265 = vmatpush2.msra.mxu0 0.0
    %266 = vmatprep.subr.mxu0 0.0
    %267 = vmatpush2.msra.mxu0 0.0
    %268 = vmatprep.subr.mxu0 0.0
    %269 = vmatpush2.msra.mxu0 0.0
    %270 = vmatprep.subr.mxu0 0.0
    %271 = vmatpush2.msra.mxu0 0.0
    %272 = vmatprep.subr.mxu0 0.0
    %273 = vmatpush2.msra.mxu0 0.0
    %274 = vmatprep.subr.mxu0 0.0
    %275 = vmatpush2.msra.mxu0 0.0
    %276 = vmatprep.subr.mxu0 0.0
    %277 = vmatpush2.msra.mxu0 0.0
    %278 = vmatprep.subr.mxu0 0.0
    %279 = vmatpush2.msra.mxu0 0.0
    %280 = vmatprep.subr.mxu0 0.0
    %281 = vmatpush2.msra.mxu0 0.0
    %282 = vmatprep.subr.mxu0 0.0
    %283 = vmatpush2.msra.mxu0 0.0
    %284 = vmatprep.subr.mxu0 0.0
    %285 = vmatpush2.msra.mxu0 0.0
    %286 = vmatprep.subr.mxu0 0.0
    %287 = vmatpush2.msra.mxu0 0.0
    %288 = vmatprep.subr.mxu0 0.0
    %289 = vmatpush2.msra.mxu0 0.0
    %290 = vmatprep.subr.mxu0 0.0
    %291 = vmatpush2.msra.mxu0 0.0
    %292 = vmatprep.mubr.f32.mxu0 0.0
    %293 = vmatmul.mubr.f32.gmra.mxu0 %v64
    %v294 = vpop.f32.mrf.mxu0
    %v295 = vadd.f32 0.0, %v294
    %v296 = vpop.f32.mrf.mxu0
    %297 = vmatprep.mubr.f32.mxu0 0.0
    %298 = vmatmul.mubr.f32.gmra.mxu0 %v67
    %v299 = vpop.f32.mrf.mxu0
    %v300 = vadd.f32 0.0, %v299
    %v301 = vpop.f32.mrf.mxu0
    %302 = vdwg.mxu0
    %v304 = vsel %vm62, %v295, 0
    %v307 = vsel %vm62, %v300, 0
    %309 = vmatprep.subr.mxu0 0.0
    %310 = vmatpush1.msra.mxu0 0.0
    %311 = vmatprep.subr.mxu0 0.0
    %312 = vmatpush1.msra.mxu0 0.0
    %313 = vmatprep.subr.mxu0 0.0
    %314 = vmatpush1.msra.mxu0 0.0
    %315 = vmatprep.subr.mxu0 0.0
    %316 = vmatpush1.msra.mxu0 0.0
    %317 = vmatprep.subr.mxu0 0.0
    %318 = vmatpush1.msra.mxu0 0.0
    %319 = vmatprep.subr.mxu0 0.0
    %320 = vmatpush1.msra.mxu0 0.0
    %321 = vmatprep.subr.mxu0 0.0
    %322 = vmatpush1.msra.mxu0 0.0
    %323 = vmatprep.subr.mxu0 0.0
    %324 = vmatpush1.msra.mxu0 0.0
    %325 = vmatprep.subr.mxu0 0.0
    %326 = vmatpush1.msra.mxu0 0.0
    %327 = vmatprep.subr.mxu0 0.0
    %328 = vmatpush1.msra.mxu0 0.0
    %329 = vmatprep.subr.mxu0 0.0
    %330 = vmatpush1.msra.mxu0 0.0
    %331 = vmatprep.subr.mxu0 0.0
    %332 = vmatpush1.msra.mxu0 0.0
    %333 = vmatprep.subr.mxu0 0.0
    %334 = vmatpush1.msra.mxu0 0.0
    %335 = vmatprep.subr.mxu0 0.0
    %336 = vmatpush1.msra.mxu0 0.0
    %337 = vmatprep.subr.mxu0 0.0
    %338 = vmatpush1.msra.mxu0 %v59
    %339 = vmatprep.subr.mxu0 0.0
    %340 = vmatpush1.msra.mxu0 %v58
    %341 = vmatprep.subr.mxu0 0.0
    %342 = vmatpush2.msra.mxu0 0.0
    %343 = vmatprep.subr.mxu0 0.0
    %344 = vmatpush2.msra.mxu0 0.0
    %345 = vmatprep.subr.mxu0 0.0
    %346 = vmatpush2.msra.mxu0 0.0
    %347 = vmatprep.subr.mxu0 0.0
    %348 = vmatpush2.msra.mxu0 0.0
    %349 = vmatprep.subr.mxu0 0.0
    %350 = vmatpush2.msra.mxu0 0.0
    %351 = vmatprep.subr.mxu0 0.0
    %352 = vmatpush2.msra.mxu0 0.0
    %353 = vmatprep.subr.mxu0 0.0
    %354 = vmatpush2.msra.mxu0 0.0
    %355 = vmatprep.subr.mxu0 0.0
    %356 = vmatpush2.msra.mxu0 0.0
    %357 = vmatprep.subr.mxu0 0.0
    %358 = vmatpush2.msra.mxu0 0.0
    %359 = vmatprep.subr.mxu0 0.0
    %360 = vmatpush2.msra.mxu0 0.0
    %361 = vmatprep.subr.mxu0 0.0
    %362 = vmatpush2.msra.mxu0 0.0
    %363 = vmatprep.subr.mxu0 0.0
    %364 = vmatpush2.msra.mxu0 0.0
    %365 = vmatprep.subr.mxu0 0.0
    %366 = vmatpush2.msra.mxu0 0.0
    %367 = vmatprep.subr.mxu0 0.0
    %368 = vmatpush2.msra.mxu0 0.0
    %369 = vmatprep.subr.mxu0 0.0
    %370 = vmatpush2.msra.mxu0 0.0
    %371 = vmatprep.subr.mxu0 0.0
    %372 = vmatpush2.msra.mxu0 0.0
    %373 = vmatprep.mubr.f32.mxu0 0.0
    %374 = vmatmul.mubr.f32.gmra.mxu0 %v304
    %v375 = vpop.f32.mrf.mxu0
    %v376 = vadd.f32 0.0, %v375
    %v377 = vpop.f32.mrf.mxu0
    %378 = vmatprep.mubr.f32.mxu0 0.0
    %379 = vmatmul.mubr.f32.gmra.mxu0 %v307
    %v380 = vpop.f32.mrf.mxu0
    %v381 = vadd.f32 0.0, %v380
    %v382 = vpop.f32.mrf.mxu0
    %383 = vdwg.mxu0
    %s384 = scalar_lea.vmem [#allocation5], 32
    %v385 = vld [vmem:[%s384] sm:$0xff]
    %v386 = vld [vmem:[%s384 + $0x8] sm:$0xff]
    %387 = vmatprep.subr.mxu0 0.0
    %388 = vmatpush1.msra.mxu0 0.0
    %389 = vmatprep.subr.mxu0 0.0
    %390 = vmatpush1.msra.mxu0 0.0
    %391 = vmatprep.subr.mxu0 0.0
    %392 = vmatpush1.msra.mxu0 0.0
    %393 = vmatprep.subr.mxu0 0.0
    %394 = vmatpush1.msra.mxu0 0.0
    %395 = vmatprep.subr.mxu0 0.0
    %396 = vmatpush1.msra.mxu0 0.0
    %397 = vmatprep.subr.mxu0 0.0
    %398 = vmatpush1.msra.mxu0 0.0
    %399 = vmatprep.subr.mxu0 0.0
    %400 = vmatpush1.msra.mxu0 0.0
    %401 = vmatprep.subr.mxu0 0.0
    %402 = vmatpush1.msra.mxu0 0.0
    %403 = vmatprep.subr.mxu0 0.0
    %404 = vmatpush1.msra.mxu0 0.0
    %405 = vmatprep.subr.mxu0 0.0
    %406 = vmatpush1.msra.mxu0 0.0
    %407 = vmatprep.subr.mxu0 0.0
    %408 = vmatpush1.msra.mxu0 0.0
    %409 = vmatprep.subr.mxu0 0.0
    %410 = vmatpush1.msra.mxu0 0.0
    %411 = vmatprep.subr.mxu0 0.0
    %412 = vmatpush1.msra.mxu0 0.0
    %413 = vmatprep.subr.mxu0 0.0
    %414 = vmatpush1.msra.mxu0 0.0
    %415 = vmatprep.subr.mxu0 0.0
    %416 = vmatpush1.msra.mxu0 %v386
    %417 = vmatprep.subr.mxu0 0.0
    %418 = vmatpush1.msra.mxu0 %v385
    %419 = vmatprep.subr.mxu0 0.0
    %420 = vmatpush2.msra.mxu0 0.0
    %421 = vmatprep.subr.mxu0 0.0
    %422 = vmatpush2.msra.mxu0 0.0
    %423 = vmatprep.subr.mxu0 0.0
    %424 = vmatpush2.msra.mxu0 0.0
    %425 = vmatprep.subr.mxu0 0.0
    %426 = vmatpush2.msra.mxu0 0.0
    %427 = vmatprep.subr.mxu0 0.0
    %428 = vmatpush2.msra.mxu0 0.0
    %429 = vmatprep.subr.mxu0 0.0
    %430 = vmatpush2.msra.mxu0 0.0
    %431 = vmatprep.subr.mxu0 0.0
    %432 = vmatpush2.msra.mxu0 0.0
    %433 = vmatprep.subr.mxu0 0.0
    %434 = vmatpush2.msra.mxu0 0.0
    %435 = vmatprep.subr.mxu0 0.0
    %436 = vmatpush2.msra.mxu0 0.0
    %437 = vmatprep.subr.mxu0 0.0
    %438 = vmatpush2.msra.mxu0 0.0
    %439 = vmatprep.subr.mxu0 0.0
    %440 = vmatpush2.msra.mxu0 0.0
    %441 = vmatprep.subr.mxu0 0.0
    %442 = vmatpush2.msra.mxu0 0.0
    %443 = vmatprep.subr.mxu0 0.0
    %444 = vmatpush2.msra.mxu0 0.0
    %445 = vmatprep.subr.mxu0 0.0
    %446 = vmatpush2.msra.mxu0 0.0
    %447 = vmatprep.subr.mxu0 0.0
    %448 = vmatpush2.msra.mxu0 0.0
    %449 = vmatprep.subr.mxu0 0.0
    %450 = vmatpush2.msra.mxu0 0.0
    %451 = vmatprep.mubr.f32.mxu0 0.0
    %452 = vmatmul.mubr.f32.gmra.mxu0 %v64
    %v453 = vpop.f32.mrf.mxu0
    %v454 = vadd.f32 0.0, %v453
    %v455 = vpop.f32.mrf.mxu0
    %456 = vmatprep.mubr.f32.mxu0 0.0
    %457 = vmatmul.mubr.f32.gmra.mxu0 %v67
    %v458 = vpop.f32.mrf.mxu0
    %v459 = vadd.f32 0.0, %v458
    %v460 = vpop.f32.mrf.mxu0
    %461 = vdwg.mxu0
    %v463 = vsel %vm62, %v454, 0
    %v466 = vsel %vm62, %v459, 0
    %468 = vmatprep.subr.mxu0 0.0
    %469 = vmatpush1.msra.mxu0 0.0
    %470 = vmatprep.subr.mxu0 0.0
    %471 = vmatpush1.msra.mxu0 0.0
    %472 = vmatprep.subr.mxu0 0.0
    %473 = vmatpush1.msra.mxu0 0.0
    %474 = vmatprep.subr.mxu0 0.0
    %475 = vmatpush1.msra.mxu0 0.0
    %476 = vmatprep.subr.mxu0 0.0
    %477 = vmatpush1.msra.mxu0 0.0
    %478 = vmatprep.subr.mxu0 0.0
    %479 = vmatpush1.msra.mxu0 0.0
    %480 = vmatprep.subr.mxu0 0.0
    %481 = vmatpush1.msra.mxu0 0.0
    %482 = vmatprep.subr.mxu0 0.0
    %483 = vmatpush1.msra.mxu0 0.0
    %484 = vmatprep.subr.mxu0 0.0
    %485 = vmatpush1.msra.mxu0 0.0
    %486 = vmatprep.subr.mxu0 0.0
    %487 = vmatpush1.msra.mxu0 0.0
    %488 = vmatprep.subr.mxu0 0.0
    %489 = vmatpush1.msra.mxu0 0.0
    %490 = vmatprep.subr.mxu0 0.0
    %491 = vmatpush1.msra.mxu0 0.0
    %492 = vmatprep.subr.mxu0 0.0
    %493 = vmatpush1.msra.mxu0 0.0
    %494 = vmatprep.subr.mxu0 0.0
    %495 = vmatpush1.msra.mxu0 0.0
    %496 = vmatprep.subr.mxu0 0.0
    %497 = vmatpush1.msra.mxu0 %v59
    %498 = vmatprep.subr.mxu0 0.0
    %499 = vmatpush1.msra.mxu0 %v58
    %500 = vmatprep.subr.mxu0 0.0
    %501 = vmatpush2.msra.mxu0 0.0
    %502 = vmatprep.subr.mxu0 0.0
    %503 = vmatpush2.msra.mxu0 0.0
    %504 = vmatprep.subr.mxu0 0.0
    %505 = vmatpush2.msra.mxu0 0.0
    %506 = vmatprep.subr.mxu0 0.0
    %507 = vmatpush2.msra.mxu0 0.0
    %508 = vmatprep.subr.mxu0 0.0
    %509 = vmatpush2.msra.mxu0 0.0
    %510 = vmatprep.subr.mxu0 0.0
    %511 = vmatpush2.msra.mxu0 0.0
    %512 = vmatprep.subr.mxu0 0.0
    %513 = vmatpush2.msra.mxu0 0.0
    %514 = vmatprep.subr.mxu0 0.0
    %515 = vmatpush2.msra.mxu0 0.0
    %516 = vmatprep.subr.mxu0 0.0
    %517 = vmatpush2.msra.mxu0 0.0
    %518 = vmatprep.subr.mxu0 0.0
    %519 = vmatpush2.msra.mxu0 0.0
    %520 = vmatprep.subr.mxu0 0.0
    %521 = vmatpush2.msra.mxu0 0.0
    %522 = vmatprep.subr.mxu0 0.0
    %523 = vmatpush2.msra.mxu0 0.0
    %524 = vmatprep.subr.mxu0 0.0
    %525 = vmatpush2.msra.mxu0 0.0
    %526 = vmatprep.subr.mxu0 0.0
    %527 = vmatpush2.msra.mxu0 0.0
    %528 = vmatprep.subr.mxu0 0.0
    %529 = vmatpush2.msra.mxu0 0.0
    %530 = vmatprep.subr.mxu0 0.0
    %531 = vmatpush2.msra.mxu0 0.0
    %532 = vmatprep.mubr.f32.mxu0 0.0
    %533 = vmatmul.mubr.f32.gmra.mxu0 %v463
    %v534 = vpop.f32.mrf.mxu0
    %v535 = vadd.f32 0.0, %v534
    %v536 = vpop.f32.mrf.mxu0
    %537 = vmatprep.mubr.f32.mxu0 0.0
    %538 = vmatmul.mubr.f32.gmra.mxu0 %v466
    %v539 = vpop.f32.mrf.mxu0
    %v540 = vadd.f32 0.0, %v539
    %v541 = vpop.f32.mrf.mxu0
    %542 = vdwg.mxu0
    %s543 = scalar_lea.vmem [#allocation5], 48
    %v544 = vld [vmem:[%s543] sm:$0xff]
    %v545 = vld [vmem:[%s543 + $0x8] sm:$0xff]
    %546 = vmatprep.subr.mxu0 0.0
    %547 = vmatpush1.msra.mxu0 0.0
    %548 = vmatprep.subr.mxu0 0.0
    %549 = vmatpush1.msra.mxu0 0.0
    %550 = vmatprep.subr.mxu0 0.0
    %551 = vmatpush1.msra.mxu0 0.0
    %552 = vmatprep.subr.mxu0 0.0
    %553 = vmatpush1.msra.mxu0 0.0
    %554 = vmatprep.subr.mxu0 0.0
    %555 = vmatpush1.msra.mxu0 0.0
    %556 = vmatprep.subr.mxu0 0.0
    %557 = vmatpush1.msra.mxu0 0.0
    %558 = vmatprep.subr.mxu0 0.0
    %559 = vmatpush1.msra.mxu0 0.0
    %560 = vmatprep.subr.mxu0 0.0
    %561 = vmatpush1.msra.mxu0 0.0
    %562 = vmatprep.subr.mxu0 0.0
    %563 = vmatpush1.msra.mxu0 0.0
    %564 = vmatprep.subr.mxu0 0.0
    %565 = vmatpush1.msra.mxu0 0.0
    %566 = vmatprep.subr.mxu0 0.0
    %567 = vmatpush1.msra.mxu0 0.0
    %568 = vmatprep.subr.mxu0 0.0
    %569 = vmatpush1.msra.mxu0 0.0
    %570 = vmatprep.subr.mxu0 0.0
    %571 = vmatpush1.msra.mxu0 0.0
    %572 = vmatprep.subr.mxu0 0.0
    %573 = vmatpush1.msra.mxu0 0.0
    %574 = vmatprep.subr.mxu0 0.0
    %575 = vmatpush1.msra.mxu0 %v545
    %576 = vmatprep.subr.mxu0 0.0
    %577 = vmatpush1.msra.mxu0 %v544
    %578 = vmatprep.subr.mxu0 0.0
    %579 = vmatpush2.msra.mxu0 0.0
    %580 = vmatprep.subr.mxu0 0.0
    %581 = vmatpush2.msra.mxu0 0.0
    %582 = vmatprep.subr.mxu0 0.0
    %583 = vmatpush2.msra.mxu0 0.0
    %584 = vmatprep.subr.mxu0 0.0
    %585 = vmatpush2.msra.mxu0 0.0
    %586 = vmatprep.subr.mxu0 0.0
    %587 = vmatpush2.msra.mxu0 0.0
    %588 = vmatprep.subr.mxu0 0.0
    %589 = vmatpush2.msra.mxu0 0.0
    %590 = vmatprep.subr.mxu0 0.0
    %591 = vmatpush2.msra.mxu0 0.0
    %592 = vmatprep.subr.mxu0 0.0
    %593 = vmatpush2.msra.mxu0 0.0
    %594 = vmatprep.subr.mxu0 0.0
    %595 = vmatpush2.msra.mxu0 0.0
    %596 = vmatprep.subr.mxu0 0.0
    %597 = vmatpush2.msra.mxu0 0.0
    %598 = vmatprep.subr.mxu0 0.0
    %599 = vmatpush2.msra.mxu0 0.0
    %600 = vmatprep.subr.mxu0 0.0
    %601 = vmatpush2.msra.mxu0 0.0
    %602 = vmatprep.subr.mxu0 0.0
    %603 = vmatpush2.msra.mxu0 0.0
    %604 = vmatprep.subr.mxu0 0.0
    %605 = vmatpush2.msra.mxu0 0.0
    %606 = vmatprep.subr.mxu0 0.0
    %607 = vmatpush2.msra.mxu0 0.0
    %608 = vmatprep.subr.mxu0 0.0
    %609 = vmatpush2.msra.mxu0 0.0
    %610 = vmatprep.mubr.f32.mxu0 0.0
    %611 = vmatmul.mubr.f32.gmra.mxu0 %v64
    %v612 = vpop.f32.mrf.mxu0
    %v613 = vadd.f32 0.0, %v612
    %v614 = vpop.f32.mrf.mxu0
    %615 = vmatprep.mubr.f32.mxu0 0.0
    %616 = vmatmul.mubr.f32.gmra.mxu0 %v67
    %v617 = vpop.f32.mrf.mxu0
    %v618 = vadd.f32 0.0, %v617
    %v619 = vpop.f32.mrf.mxu0
    %620 = vdwg.mxu0
    %v622 = vsel %vm62, %v613, 0
    %v625 = vsel %vm62, %v618, 0
    %627 = vmatprep.subr.mxu0 0.0
    %628 = vmatpush1.msra.mxu0 0.0
    %629 = vmatprep.subr.mxu0 0.0
    %630 = vmatpush1.msra.mxu0 0.0
    %631 = vmatprep.subr.mxu0 0.0
    %632 = vmatpush1.msra.mxu0 0.0
    %633 = vmatprep.subr.mxu0 0.0
    %634 = vmatpush1.msra.mxu0 0.0
    %635 = vmatprep.subr.mxu0 0.0
    %636 = vmatpush1.msra.mxu0 0.0
    %637 = vmatprep.subr.mxu0 0.0
    %638 = vmatpush1.msra.mxu0 0.0
    %639 = vmatprep.subr.mxu0 0.0
    %640 = vmatpush1.msra.mxu0 0.0
    %641 = vmatprep.subr.mxu0 0.0
    %642 = vmatpush1.msra.mxu0 0.0
    %643 = vmatprep.subr.mxu0 0.0
    %644 = vmatpush1.msra.mxu0 0.0
    %645 = vmatprep.subr.mxu0 0.0
    %646 = vmatpush1.msra.mxu0 0.0
    %647 = vmatprep.subr.mxu0 0.0
    %648 = vmatpush1.msra.mxu0 0.0
    %649 = vmatprep.subr.mxu0 0.0
    %650 = vmatpush1.msra.mxu0 0.0
    %651 = vmatprep.subr.mxu0 0.0
    %652 = vmatpush1.msra.mxu0 0.0
    %653 = vmatprep.subr.mxu0 0.0
    %654 = vmatpush1.msra.mxu0 0.0
    %655 = vmatprep.subr.mxu0 0.0
    %656 = vmatpush1.msra.mxu0 %v59
    %657 = vmatprep.subr.mxu0 0.0
    %658 = vmatpush1.msra.mxu0 %v58
    %659 = vmatprep.subr.mxu0 0.0
    %660 = vmatpush2.msra.mxu0 0.0
    %661 = vmatprep.subr.mxu0 0.0
    %662 = vmatpush2.msra.mxu0 0.0
    %663 = vmatprep.subr.mxu0 0.0
    %664 = vmatpush2.msra.mxu0 0.0
    %665 = vmatprep.subr.mxu0 0.0
    %666 = vmatpush2.msra.mxu0 0.0
    %667 = vmatprep.subr.mxu0 0.0
    %668 = vmatpush2.msra.mxu0 0.0
    %669 = vmatprep.subr.mxu0 0.0
    %670 = vmatpush2.msra.mxu0 0.0
    %671 = vmatprep.subr.mxu0 0.0
    %672 = vmatpush2.msra.mxu0 0.0
    %673 = vmatprep.subr.mxu0 0.0
    %674 = vmatpush2.msra.mxu0 0.0
    %675 = vmatprep.subr.mxu0 0.0
    %676 = vmatpush2.msra.mxu0 0.0
    %677 = vmatprep.subr.mxu0 0.0
    %678 = vmatpush2.msra.mxu0 0.0
    %679 = vmatprep.subr.mxu0 0.0
    %680 = vmatpush2.msra.mxu0 0.0
    %681 = vmatprep.subr.mxu0 0.0
    %682 = vmatpush2.msra.mxu0 0.0
    %683 = vmatprep.subr.mxu0 0.0
    %684 = vmatpush2.msra.mxu0 0.0
    %685 = vmatprep.subr.mxu0 0.0
    %686 = vmatpush2.msra.mxu0 0.0
    %687 = vmatprep.subr.mxu0 0.0
    %688 = vmatpush2.msra.mxu0 0.0
    %689 = vmatprep.subr.mxu0 0.0
    %690 = vmatpush2.msra.mxu0 0.0
    %691 = vmatprep.mubr.f32.mxu0 0.0
    %692 = vmatmul.mubr.f32.gmra.mxu0 %v622
    %v693 = vpop.f32.mrf.mxu0
    %v694 = vadd.f32 0.0, %v693
    %v695 = vpop.f32.mrf.mxu0
    %696 = vmatprep.mubr.f32.mxu0 0.0
    %697 = vmatmul.mubr.f32.gmra.mxu0 %v625
    %v698 = vpop.f32.mrf.mxu0
    %v699 = vadd.f32 0.0, %v698
    %v700 = vpop.f32.mrf.mxu0
    %701 = vdwg.mxu0
    %s702 = scalar_lea.vmem [#allocation5], 64
    %v703 = vld [vmem:[%s702] sm:$0xff]
    %v704 = vld [vmem:[%s702 + $0x8] sm:$0xff]
    %705 = vmatprep.subr.mxu0 0.0
    %706 = vmatpush1.msra.mxu0 0.0
    %707 = vmatprep.subr.mxu0 0.0
    %708 = vmatpush1.msra.mxu0 0.0
    %709 = vmatprep.subr.mxu0 0.0
    %710 = vmatpush1.msra.mxu0 0.0
    %711 = vmatprep.subr.mxu0 0.0
    %712 = vmatpush1.msra.mxu0 0.0
    %713 = vmatprep.subr.mxu0 0.0
    %714 = vmatpush1.msra.mxu0 0.0
    %715 = vmatprep.subr.mxu0 0.0
    %716 = vmatpush1.msra.mxu0 0.0
    %717 = vmatprep.subr.mxu0 0.0
    %718 = vmatpush1.msra.mxu0 0.0
    %719 = vmatprep.subr.mxu0 0.0
    %720 = vmatpush1.msra.mxu0 0.0
    %721 = vmatprep.subr.mxu0 0.0
    %722 = vmatpush1.msra.mxu0 0.0
    %723 = vmatprep.subr.mxu0 0.0
    %724 = vmatpush1.msra.mxu0 0.0
    %725 = vmatprep.subr.mxu0 0.0
    %726 = vmatpush1.msra.mxu0 0.0
    %727 = vmatprep.subr.mxu0 0.0
    %728 = vmatpush1.msra.mxu0 0.0
    %729 = vmatprep.subr.mxu0 0.0
    %730 = vmatpush1.msra.mxu0 0.0
    %731 = vmatprep.subr.mxu0 0.0
    %732 = vmatpush1.msra.mxu0 0.0
    %733 = vmatprep.subr.mxu0 0.0
    %734 = vmatpush1.msra.mxu0 %v704
    %735 = vmatprep.subr.mxu0 0.0
    %736 = vmatpush1.msra.mxu0 %v703
    %737 = vmatprep.subr.mxu0 0.0
    %738 = vmatpush2.msra.mxu0 0.0
    %739 = vmatprep.subr.mxu0 0.0
    %740 = vmatpush2.msra.mxu0 0.0
    %741 = vmatprep.subr.mxu0 0.0
    %742 = vmatpush2.msra.mxu0 0.0
    %743 = vmatprep.subr.mxu0 0.0
    %744 = vmatpush2.msra.mxu0 0.0
    %745 = vmatprep.subr.mxu0 0.0
    %746 = vmatpush2.msra.mxu0 0.0
    %747 = vmatprep.subr.mxu0 0.0
    %748 = vmatpush2.msra.mxu0 0.0
    %749 = vmatprep.subr.mxu0 0.0
    %750 = vmatpush2.msra.mxu0 0.0
    %751 = vmatprep.subr.mxu0 0.0
    %752 = vmatpush2.msra.mxu0 0.0
    %753 = vmatprep.subr.mxu0 0.0
    %754 = vmatpush2.msra.mxu0 0.0
    %755 = vmatprep.subr.mxu0 0.0
    %756 = vmatpush2.msra.mxu0 0.0
    %757 = vmatprep.subr.mxu0 0.0
    %758 = vmatpush2.msra.mxu0 0.0
    %759 = vmatprep.subr.mxu0 0.0
    %760 = vmatpush2.msra.mxu0 0.0
    %761 = vmatprep.subr.mxu0 0.0
    %762 = vmatpush2.msra.mxu0 0.0
    %763 = vmatprep.subr.mxu0 0.0
    %764 = vmatpush2.msra.mxu0 0.0
    %765 = vmatprep.subr.mxu0 0.0
    %766 = vmatpush2.msra.mxu0 0.0
    %767 = vmatprep.subr.mxu0 0.0
    %768 = vmatpush2.msra.mxu0 0.0
    %769 = vmatprep.mubr.f32.mxu0 0.0
    %770 = vmatmul.mubr.f32.gmra.mxu0 %v64
    %v771 = vpop.f32.mrf.mxu0
    %v772 = vadd.f32 0.0, %v771
    %v773 = vpop.f32.mrf.mxu0
    %774 = vmatprep.mubr.f32.mxu0 0.0
    %775 = vmatmul.mubr.f32.gmra.mxu0 %v67
    %v776 = vpop.f32.mrf.mxu0
    %v777 = vadd.f32 0.0, %v776
    %v778 = vpop.f32.mrf.mxu0
    %779 = vdwg.mxu0
    %v781 = vsel %vm62, %v772, 0
    %v784 = vsel %vm62, %v777, 0
    %786 = vmatprep.subr.mxu0 0.0
    %787 = vmatpush1.msra.mxu0 0.0
    %788 = vmatprep.subr.mxu0 0.0
    %789 = vmatpush1.msra.mxu0 0.0
    %790 = vmatprep.subr.mxu0 0.0
    %791 = vmatpush1.msra.mxu0 0.0
    %792 = vmatprep.subr.mxu0 0.0
    %793 = vmatpush1.msra.mxu0 0.0
    %794 = vmatprep.subr.mxu0 0.0
    %795 = vmatpush1.msra.mxu0 0.0
    %796 = vmatprep.subr.mxu0 0.0
    %797 = vmatpush1.msra.mxu0 0.0
    %798 = vmatprep.subr.mxu0 0.0
    %799 = vmatpush1.msra.mxu0 0.0
    %800 = vmatprep.subr.mxu0 0.0
    %801 = vmatpush1.msra.mxu0 0.0
    %802 = vmatprep.subr.mxu0 0.0
    %803 = vmatpush1.msra.mxu0 0.0
    %804 = vmatprep.subr.mxu0 0.0
    %805 = vmatpush1.msra.mxu0 0.0
    %806 = vmatprep.subr.mxu0 0.0
    %807 = vmatpush1.msra.mxu0 0.0
    %808 = vmatprep.subr.mxu0 0.0
    %809 = vmatpush1.msra.mxu0 0.0
    %810 = vmatprep.subr.mxu0 0.0
    %811 = vmatpush1.msra.mxu0 0.0
    %812 = vmatprep.subr.mxu0 0.0
    %813 = vmatpush1.msra.mxu0 0.0
    %814 = vmatprep.subr.mxu0 0.0
    %815 = vmatpush1.msra.mxu0 %v59
    %816 = vmatprep.subr.mxu0 0.0
    %817 = vmatpush1.msra.mxu0 %v58
    %818 = vmatprep.subr.mxu0 0.0
    %819 = vmatpush2.msra.mxu0 0.0
    %820 = vmatprep.subr.mxu0 0.0
    %821 = vmatpush2.msra.mxu0 0.0
    %822 = vmatprep.subr.mxu0 0.0
    %823 = vmatpush2.msra.mxu0 0.0
    %824 = vmatprep.subr.mxu0 0.0
    %825 = vmatpush2.msra.mxu0 0.0
    %826 = vmatprep.subr.mxu0 0.0
    %827 = vmatpush2.msra.mxu0 0.0
    %828 = vmatprep.subr.mxu0 0.0
    %829 = vmatpush2.msra.mxu0 0.0
    %830 = vmatprep.subr.mxu0 0.0
    %831 = vmatpush2.msra.mxu0 0.0
    %832 = vmatprep.subr.mxu0 0.0
    %833 = vmatpush2.msra.mxu0 0.0
    %834 = vmatprep.subr.mxu0 0.0
    %835 = vmatpush2.msra.mxu0 0.0
    %836 = vmatprep.subr.mxu0 0.0
    %837 = vmatpush2.msra.mxu0 0.0
    %838 = vmatprep.subr.mxu0 0.0
    %839 = vmatpush2.msra.mxu0 0.0
    %840 = vmatprep.subr.mxu0 0.0
    %841 = vmatpush2.msra.mxu0 0.0
    %842 = vmatprep.subr.mxu0 0.0
    %843 = vmatpush2.msra.mxu0 0.0
    %844 = vmatprep.subr.mxu0 0.0
    %845 = vmatpush2.msra.mxu0 0.0
    %846 = vmatprep.subr.mxu0 0.0
    %847 = vmatpush2.msra.mxu0 0.0
    %848 = vmatprep.subr.mxu0 0.0
    %849 = vmatpush2.msra.mxu0 0.0
    %850 = vmatprep.mubr.f32.mxu0 0.0
    %851 = vmatmul.mubr.f32.gmra.mxu0 %v781
    %v852 = vpop.f32.mrf.mxu0
    %v853 = vadd.f32 0.0, %v852
    %v854 = vpop.f32.mrf.mxu0
    %855 = vmatprep.mubr.f32.mxu0 0.0
    %856 = vmatmul.mubr.f32.gmra.mxu0 %v784
    %v857 = vpop.f32.mrf.mxu0
    %v858 = vadd.f32 0.0, %v857
    %v859 = vpop.f32.mrf.mxu0
    %860 = vdwg.mxu0
    %s861 = scalar_lea.vmem [#allocation5], 80
    %v862 = vld [vmem:[%s861] sm:$0xff]
    %v863 = vld [vmem:[%s861 + $0x8] sm:$0xff]
    %864 = vmatprep.subr.mxu0 0.0
    %865 = vmatpush1.msra.mxu0 0.0
    %866 = vmatprep.subr.mxu0 0.0
    %867 = vmatpush1.msra.mxu0 0.0
    %868 = vmatprep.subr.mxu0 0.0
    %869 = vmatpush1.msra.mxu0 0.0
    %870 = vmatprep.subr.mxu0 0.0
    %871 = vmatpush1.msra.mxu0 0.0
    %872 = vmatprep.subr.mxu0 0.0
    %873 = vmatpush1.msra.mxu0 0.0
    %874 = vmatprep.subr.mxu0 0.0
    %875 = vmatpush1.msra.mxu0 0.0
    %876 = vmatprep.subr.mxu0 0.0
    %877 = vmatpush1.msra.mxu0 0.0
    %878 = vmatprep.subr.mxu0 0.0
    %879 = vmatpush1.msra.mxu0 0.0
    %880 = vmatprep.subr.mxu0 0.0
    %881 = vmatpush1.msra.mxu0 0.0
    %882 = vmatprep.subr.mxu0 0.0
    %883 = vmatpush1.msra.mxu0 0.0
    %884 = vmatprep.subr.mxu0 0.0
    %885 = vmatpush1.msra.mxu0 0.0
    %886 = vmatprep.subr.mxu0 0.0
    %887 = vmatpush1.msra.mxu0 0.0
    %888 = vmatprep.subr.mxu0 0.0
    %889 = vmatpush1.msra.mxu0 0.0
    %890 = vmatprep.subr.mxu0 0.0
    %891 = vmatpush1.msra.mxu0 0.0
    %892 = vmatprep.subr.mxu0 0.0
    %893 = vmatpush1.msra.mxu0 %v863
    %894 = vmatprep.subr.mxu0 0.0
    %895 = vmatpush1.msra.mxu0 %v862
    %896 = vmatprep.subr.mxu0 0.0
    %897 = vmatpush2.msra.mxu0 0.0
    %898 = vmatprep.subr.mxu0 0.0
    %899 = vmatpush2.msra.mxu0 0.0
    %900 = vmatprep.subr.mxu0 0.0
    %901 = vmatpush2.msra.mxu0 0.0
    %902 = vmatprep.subr.mxu0 0.0
    %903 = vmatpush2.msra.mxu0 0.0
    %904 = vmatprep.subr.mxu0 0.0
    %905 = vmatpush2.msra.mxu0 0.0
    %906 = vmatprep.subr.mxu0 0.0
    %907 = vmatpush2.msra.mxu0 0.0
    %908 = vmatprep.subr.mxu0 0.0
    %909 = vmatpush2.msra.mxu0 0.0
    %910 = vmatprep.subr.mxu0 0.0
    %911 = vmatpush2.msra.mxu0 0.0
    %912 = vmatprep.subr.mxu0 0.0
    %913 = vmatpush2.msra.mxu0 0.0
    %914 = vmatprep.subr.mxu0 0.0
    %915 = vmatpush2.msra.mxu0 0.0
    %916 = vmatprep.subr.mxu0 0.0
    %917 = vmatpush2.msra.mxu0 0.0
    %918 = vmatprep.subr.mxu0 0.0
    %919 = vmatpush2.msra.mxu0 0.0
    %920 = vmatprep.subr.mxu0 0.0
    %921 = vmatpush2.msra.mxu0 0.0
    %922 = vmatprep.subr.mxu0 0.0
    %923 = vmatpush2.msra.mxu0 0.0
    %924 = vmatprep.subr.mxu0 0.0
    %925 = vmatpush2.msra.mxu0 0.0
    %926 = vmatprep.subr.mxu0 0.0
    %927 = vmatpush2.msra.mxu0 0.0
    %928 = vmatprep.mubr.f32.mxu0 0.0
    %929 = vmatmul.mubr.f32.gmra.mxu0 %v64
    %v930 = vpop.f32.mrf.mxu0
    %v931 = vadd.f32 0.0, %v930
    %v932 = vpop.f32.mrf.mxu0
    %933 = vmatprep.mubr.f32.mxu0 0.0
    %934 = vmatmul.mubr.f32.gmra.mxu0 %v67
    %v935 = vpop.f32.mrf.mxu0
    %v936 = vadd.f32 0.0, %v935
    %v937 = vpop.f32.mrf.mxu0
    %938 = vdwg.mxu0
    %v940 = vsel %vm62, %v931, 0
    %v943 = vsel %vm62, %v936, 0
    %945 = vmatprep.subr.mxu0 0.0
    %946 = vmatpush1.msra.mxu0 0.0
    %947 = vmatprep.subr.mxu0 0.0
    %948 = vmatpush1.msra.mxu0 0.0
    %949 = vmatprep.subr.mxu0 0.0
    %950 = vmatpush1.msra.mxu0 0.0
    %951 = vmatprep.subr.mxu0 0.0
    %952 = vmatpush1.msra.mxu0 0.0
    %953 = vmatprep.subr.mxu0 0.0
    %954 = vmatpush1.msra.mxu0 0.0
    %955 = vmatprep.subr.mxu0 0.0
    %956 = vmatpush1.msra.mxu0 0.0
    %957 = vmatprep.subr.mxu0 0.0
    %958 = vmatpush1.msra.mxu0 0.0
    %959 = vmatprep.subr.mxu0 0.0
    %960 = vmatpush1.msra.mxu0 0.0
    %961 = vmatprep.subr.mxu0 0.0
    %962 = vmatpush1.msra.mxu0 0.0
    %963 = vmatprep.subr.mxu0 0.0
    %964 = vmatpush1.msra.mxu0 0.0
    %965 = vmatprep.subr.mxu0 0.0
    %966 = vmatpush1.msra.mxu0 0.0
    %967 = vmatprep.subr.mxu0 0.0
    %968 = vmatpush1.msra.mxu0 0.0
    %969 = vmatprep.subr.mxu0 0.0
    %970 = vmatpush1.msra.mxu0 0.0
    %971 = vmatprep.subr.mxu0 0.0
    %972 = vmatpush1.msra.mxu0 0.0
    %973 = vmatprep.subr.mxu0 0.0
    %974 = vmatpush1.msra.mxu0 %v59
    %975 = vmatprep.subr.mxu0 0.0
    %976 = vmatpush1.msra.mxu0 %v58
    %977 = vmatprep.subr.mxu0 0.0
    %978 = vmatpush2.msra.mxu0 0.0
    %979 = vmatprep.subr.mxu0 0.0
    %980 = vmatpush2.msra.mxu0 0.0
    %981 = vmatprep.subr.mxu0 0.0
    %982 = vmatpush2.msra.mxu0 0.0
    %983 = vmatprep.subr.mxu0 0.0
    %984 = vmatpush2.msra.mxu0 0.0
    %985 = vmatprep.subr.mxu0 0.0
    %986 = vmatpush2.msra.mxu0 0.0
    %987 = vmatprep.subr.mxu0 0.0
    %988 = vmatpush2.msra.mxu0 0.0
    %989 = vmatprep.subr.mxu0 0.0
    %990 = vmatpush2.msra.mxu0 0.0
    %991 = vmatprep.subr.mxu0 0.0
    %992 = vmatpush2.msra.mxu0 0.0
    %993 = vmatprep.subr.mxu0 0.0
    %994 = vmatpush2.msra.mxu0 0.0
    %995 = vmatprep.subr.mxu0 0.0
    %996 = vmatpush2.msra.mxu0 0.0
    %997 = vmatprep.subr.mxu0 0.0
    %998 = vmatpush2.msra.mxu0 0.0
    %999 = vmatprep.subr.mxu0 0.0
    %1000 = vmatpush2.msra.mxu0 0.0
    %1001 = vmatprep.subr.mxu0 0.0
    %1002 = vmatpush2.msra.mxu0 0.0
    %1003 = vmatprep.subr.mxu0 0.0
    %1004 = vmatpush2.msra.mxu0 0.0
    %1005 = vmatprep.subr.mxu0 0.0
    %1006 = vmatpush2.msra.mxu0 0.0
    %1007 = vmatprep.subr.mxu0 0.0
    %1008 = vmatpush2.msra.mxu0 0.0
    %1009 = vmatprep.mubr.f32.mxu0 0.0
    %1010 = vmatmul.mubr.f32.gmra.mxu0 %v940
    %v1011 = vpop.f32.mrf.mxu0
    %v1012 = vadd.f32 0.0, %v1011
    %v1013 = vpop.f32.mrf.mxu0
    %1014 = vmatprep.mubr.f32.mxu0 0.0
    %1015 = vmatmul.mubr.f32.gmra.mxu0 %v943
    %v1016 = vpop.f32.mrf.mxu0
    %v1017 = vadd.f32 0.0, %v1016
    %v1018 = vpop.f32.mrf.mxu0
    %1019 = vdwg.mxu0
    %s1020 = scalar_lea.vmem [#allocation5], 96
    %v1021 = vld [vmem:[%s1020] sm:$0xff]
    %v1022 = vld [vmem:[%s1020 + $0x8] sm:$0xff]
    %1023 = vmatprep.subr.mxu0 0.0
    %1024 = vmatpush1.msra.mxu0 0.0
    %1025 = vmatprep.subr.mxu0 0.0
    %1026 = vmatpush1.msra.mxu0 0.0
    %1027 = vmatprep.subr.mxu0 0.0
    %1028 = vmatpush1.msra.mxu0 0.0
    %1029 = vmatprep.subr.mxu0 0.0
    %1030 = vmatpush1.msra.mxu0 0.0
    %1031 = vmatprep.subr.mxu0 0.0
    %1032 = vmatpush1.msra.mxu0 0.0
    %1033 = vmatprep.subr.mxu0 0.0
    %1034 = vmatpush1.msra.mxu0 0.0
    %1035 = vmatprep.subr.mxu0 0.0
    %1036 = vmatpush1.msra.mxu0 0.0
    %1037 = vmatprep.subr.mxu0 0.0
    %1038 = vmatpush1.msra.mxu0 0.0
    %1039 = vmatprep.subr.mxu0 0.0
    %1040 = vmatpush1.msra.mxu0 0.0
    %1041 = vmatprep.subr.mxu0 0.0
    %1042 = vmatpush1.msra.mxu0 0.0
    %1043 = vmatprep.subr.mxu0 0.0
    %1044 = vmatpush1.msra.mxu0 0.0
    %1045 = vmatprep.subr.mxu0 0.0
    %1046 = vmatpush1.msra.mxu0 0.0
    %1047 = vmatprep.subr.mxu0 0.0
    %1048 = vmatpush1.msra.mxu0 0.0
    %1049 = vmatprep.subr.mxu0 0.0
    %1050 = vmatpush1.msra.mxu0 0.0
    %1051 = vmatprep.subr.mxu0 0.0
    %1052 = vmatpush1.msra.mxu0 %v1022
    %1053 = vmatprep.subr.mxu0 0.0
    %1054 = vmatpush1.msra.mxu0 %v1021
    %1055 = vmatprep.subr.mxu0 0.0
    %1056 = vmatpush2.msra.mxu0 0.0
    %1057 = vmatprep.subr.mxu0 0.0
    %1058 = vmatpush2.msra.mxu0 0.0
    %1059 = vmatprep.subr.mxu0 0.0
    %1060 = vmatpush2.msra.mxu0 0.0
    %1061 = vmatprep.subr.mxu0 0.0
    %1062 = vmatpush2.msra.mxu0 0.0
    %1063 = vmatprep.subr.mxu0 0.0
    %1064 = vmatpush2.msra.mxu0 0.0
    %1065 = vmatprep.subr.mxu0 0.0
    %1066 = vmatpush2.msra.mxu0 0.0
    %1067 = vmatprep.subr.mxu0 0.0
    %1068 = vmatpush2.msra.mxu0 0.0
    %1069 = vmatprep.subr.mxu0 0.0
    %1070 = vmatpush2.msra.mxu0 0.0
    %1071 = vmatprep.subr.mxu0 0.0
    %1072 = vmatpush2.msra.mxu0 0.0
    %1073 = vmatprep.subr.mxu0 0.0
    %1074 = vmatpush2.msra.mxu0 0.0
    %1075 = vmatprep.subr.mxu0 0.0
    %1076 = vmatpush2.msra.mxu0 0.0
    %1077 = vmatprep.subr.mxu0 0.0
    %1078 = vmatpush2.msra.mxu0 0.0
    %1079 = vmatprep.subr.mxu0 0.0
    %1080 = vmatpush2.msra.mxu0 0.0
    %1081 = vmatprep.subr.mxu0 0.0
    %1082 = vmatpush2.msra.mxu0 0.0
    %1083 = vmatprep.subr.mxu0 0.0
    %1084 = vmatpush2.msra.mxu0 0.0
    %1085 = vmatprep.subr.mxu0 0.0
    %1086 = vmatpush2.msra.mxu0 0.0
    %1087 = vmatprep.mubr.f32.mxu0 0.0
    %1088 = vmatmul.mubr.f32.gmra.mxu0 %v64
    %v1089 = vpop.f32.mrf.mxu0
    %v1090 = vadd.f32 0.0, %v1089
    %v1091 = vpop.f32.mrf.mxu0
    %1092 = vmatprep.mubr.f32.mxu0 0.0
    %1093 = vmatmul.mubr.f32.gmra.mxu0 %v67
    %v1094 = vpop.f32.mrf.mxu0
    %v1095 = vadd.f32 0.0, %v1094
    %v1096 = vpop.f32.mrf.mxu0
    %1097 = vdwg.mxu0
    %v1099 = vsel %vm62, %v1090, 0
    %v1102 = vsel %vm62, %v1095, 0
    %1104 = vmatprep.subr.mxu0 0.0
    %1105 = vmatpush1.msra.mxu0 0.0
    %1106 = vmatprep.subr.mxu0 0.0
    %1107 = vmatpush1.msra.mxu0 0.0
    %1108 = vmatprep.subr.mxu0 0.0
    %1109 = vmatpush1.msra.mxu0 0.0
    %1110 = vmatprep.subr.mxu0 0.0
    %1111 = vmatpush1.msra.mxu0 0.0
    %1112 = vmatprep.subr.mxu0 0.0
    %1113 = vmatpush1.msra.mxu0 0.0
    %1114 = vmatprep.subr.mxu0 0.0
    %1115 = vmatpush1.msra.mxu0 0.0
    %1116 = vmatprep.subr.mxu0 0.0
    %1117 = vmatpush1.msra.mxu0 0.0
    %1118 = vmatprep.subr.mxu0 0.0
    %1119 = vmatpush1.msra.mxu0 0.0
    %1120 = vmatprep.subr.mxu0 0.0
    %1121 = vmatpush1.msra.mxu0 0.0
    %1122 = vmatprep.subr.mxu0 0.0
    %1123 = vmatpush1.msra.mxu0 0.0
    %1124 = vmatprep.subr.mxu0 0.0
    %1125 = vmatpush1.msra.mxu0 0.0
    %1126 = vmatprep.subr.mxu0 0.0
    %1127 = vmatpush1.msra.mxu0 0.0
    %1128 = vmatprep.subr.mxu0 0.0
    %1129 = vmatpush1.msra.mxu0 0.0
    %1130 = vmatprep.subr.mxu0 0.0
    %1131 = vmatpush1.msra.mxu0 0.0
    %1132 = vmatprep.subr.mxu0 0.0
    %1133 = vmatpush1.msra.mxu0 %v59
    %1134 = vmatprep.subr.mxu0 0.0
    %1135 = vmatpush1.msra.mxu0 %v58
    %1136 = vmatprep.subr.mxu0 0.0
    %1137 = vmatpush2.msra.mxu0 0.0
    %1138 = vmatprep.subr.mxu0 0.0
    %1139 = vmatpush2.msra.mxu0 0.0
    %1140 = vmatprep.subr.mxu0 0.0
    %1141 = vmatpush2.msra.mxu0 0.0
    %1142 = vmatprep.subr.mxu0 0.0
    %1143 = vmatpush2.msra.mxu0 0.0
    %1144 = vmatprep.subr.mxu0 0.0
    %1145 = vmatpush2.msra.mxu0 0.0
    %1146 = vmatprep.subr.mxu0 0.0
    %1147 = vmatpush2.msra.mxu0 0.0
    %1148 = vmatprep.subr.mxu0 0.0
    %1149 = vmatpush2.msra.mxu0 0.0
    %1150 = vmatprep.subr.mxu0 0.0
    %1151 = vmatpush2.msra.mxu0 0.0
    %1152 = vmatprep.subr.mxu0 0.0
    %1153 = vmatpush2.msra.mxu0 0.0
    %1154 = vmatprep.subr.mxu0 0.0
    %1155 = vmatpush2.msra.mxu0 0.0
    %1156 = vmatprep.subr.mxu0 0.0
    %1157 = vmatpush2.msra.mxu0 0.0
    %1158 = vmatprep.subr.mxu0 0.0
    %1159 = vmatpush2.msra.mxu0 0.0
    %1160 = vmatprep.subr.mxu0 0.0
    %1161 = vmatpush2.msra.mxu0 0.0
    %1162 = vmatprep.subr.mxu0 0.0
    %1163 = vmatpush2.msra.mxu0 0.0
    %1164 = vmatprep.subr.mxu0 0.0
    %1165 = vmatpush2.msra.mxu0 0.0
    %1166 = vmatprep.subr.mxu0 0.0
    %1167 = vmatpush2.msra.mxu0 0.0
    %1168 = vmatprep.mubr.f32.mxu0 0.0
    %1169 = vmatmul.mubr.f32.gmra.mxu0 %v1099
    %v1170 = vpop.f32.mrf.mxu0
    %v1171 = vadd.f32 0.0, %v1170
    %v1172 = vpop.f32.mrf.mxu0
    %1173 = vmatprep.mubr.f32.mxu0 0.0
    %1174 = vmatmul.mubr.f32.gmra.mxu0 %v1102
    %v1175 = vpop.f32.mrf.mxu0
    %v1176 = vadd.f32 0.0, %v1175
    %v1177 = vpop.f32.mrf.mxu0
    %1178 = vdwg.mxu0
    %s1179 = scalar_lea.vmem [#allocation5], 112
    %v1180 = vld [vmem:[%s1179] sm:$0xff]
    %v1181 = vld [vmem:[%s1179 + $0x8] sm:$0xff]
    %1182 = vmatprep.subr.mxu0 0.0
    %1183 = vmatpush1.msra.mxu0 0.0
    %1184 = vmatprep.subr.mxu0 0.0
    %1185 = vmatpush1.msra.mxu0 0.0
    %1186 = vmatprep.subr.mxu0 0.0
    %1187 = vmatpush1.msra.mxu0 0.0
    %1188 = vmatprep.subr.mxu0 0.0
    %1189 = vmatpush1.msra.mxu0 0.0
    %1190 = vmatprep.subr.mxu0 0.0
    %1191 = vmatpush1.msra.mxu0 0.0
    %1192 = vmatprep.subr.mxu0 0.0
    %1193 = vmatpush1.msra.mxu0 0.0
    %1194 = vmatprep.subr.mxu0 0.0
    %1195 = vmatpush1.msra.mxu0 0.0
    %1196 = vmatprep.subr.mxu0 0.0
    %1197 = vmatpush1.msra.mxu0 0.0
    %1198 = vmatprep.subr.mxu0 0.0
    %1199 = vmatpush1.msra.mxu0 0.0
    %1200 = vmatprep.subr.mxu0 0.0
    %1201 = vmatpush1.msra.mxu0 0.0
    %1202 = vmatprep.subr.mxu0 0.0
    %1203 = vmatpush1.msra.mxu0 0.0
    %1204 = vmatprep.subr.mxu0 0.0
    %1205 = vmatpush1.msra.mxu0 0.0
    %1206 = vmatprep.subr.mxu0 0.0
    %1207 = vmatpush1.msra.mxu0 0.0
    %1208 = vmatprep.subr.mxu0 0.0
    %1209 = vmatpush1.msra.mxu0 0.0
    %1210 = vmatprep.subr.mxu0 0.0
    %1211 = vmatpush1.msra.mxu0 %v1181
    %1212 = vmatprep.subr.mxu0 0.0
    %1213 = vmatpush1.msra.mxu0 %v1180
    %1214 = vmatprep.subr.mxu0 0.0
    %1215 = vmatpush2.msra.mxu0 0.0
    %1216 = vmatprep.subr.mxu0 0.0
    %1217 = vmatpush2.msra.mxu0 0.0
    %1218 = vmatprep.subr.mxu0 0.0
    %1219 = vmatpush2.msra.mxu0 0.0
    %1220 = vmatprep.subr.mxu0 0.0
    %1221 = vmatpush2.msra.mxu0 0.0
    %1222 = vmatprep.subr.mxu0 0.0
    %1223 = vmatpush2.msra.mxu0 0.0
    %1224 = vmatprep.subr.mxu0 0.0
    %1225 = vmatpush2.msra.mxu0 0.0
    %1226 = vmatprep.subr.mxu0 0.0
    %1227 = vmatpush2.msra.mxu0 0.0
    %1228 = vmatprep.subr.mxu0 0.0
    %1229 = vmatpush2.msra.mxu0 0.0
    %1230 = vmatprep.subr.mxu0 0.0
    %1231 = vmatpush2.msra.mxu0 0.0
    %1232 = vmatprep.subr.mxu0 0.0
    %1233 = vmatpush2.msra.mxu0 0.0
    %1234 = vmatprep.subr.mxu0 0.0
    %1235 = vmatpush2.msra.mxu0 0.0
    %1236 = vmatprep.subr.mxu0 0.0
    %1237 = vmatpush2.msra.mxu0 0.0
    %1238 = vmatprep.subr.mxu0 0.0
    %1239 = vmatpush2.msra.mxu0 0.0
    %1240 = vmatprep.subr.mxu0 0.0
    %1241 = vmatpush2.msra.mxu0 0.0
    %1242 = vmatprep.subr.mxu0 0.0
    %1243 = vmatpush2.msra.mxu0 0.0
    %1244 = vmatprep.subr.mxu0 0.0
    %1245 = vmatpush2.msra.mxu0 0.0
    %1246 = vmatprep.mubr.f32.mxu0 0.0
    %1247 = vmatmul.mubr.f32.gmra.mxu0 %v64
    %v1248 = vpop.f32.mrf.mxu0
    %v1249 = vadd.f32 0.0, %v1248
    %v1250 = vpop.f32.mrf.mxu0
    %1251 = vmatprep.mubr.f32.mxu0 0.0
    %1252 = vmatmul.mubr.f32.gmra.mxu0 %v67
    %v1253 = vpop.f32.mrf.mxu0
    %v1254 = vadd.f32 0.0, %v1253
    %v1255 = vpop.f32.mrf.mxu0
    %1256 = vdwg.mxu0
    %v1258 = vsel %vm62, %v1249, 0
    %v1261 = vsel %vm62, %v1254, 0
    %1263 = vmatprep.subr.mxu0 0.0
    %1264 = vmatpush1.msra.mxu0 0.0
    %1265 = vmatprep.subr.mxu0 0.0
    %1266 = vmatpush1.msra.mxu0 0.0
    %1267 = vmatprep.subr.mxu0 0.0
    %1268 = vmatpush1.msra.mxu0 0.0
    %1269 = vmatprep.subr.mxu0 0.0
    %1270 = vmatpush1.msra.mxu0 0.0
    %1271 = vmatprep.subr.mxu0 0.0
    %1272 = vmatpush1.msra.mxu0 0.0
    %1273 = vmatprep.subr.mxu0 0.0
    %1274 = vmatpush1.msra.mxu0 0.0
    %1275 = vmatprep.subr.mxu0 0.0
    %1276 = vmatpush1.msra.mxu0 0.0
    %1277 = vmatprep.subr.mxu0 0.0
    %1278 = vmatpush1.msra.mxu0 0.0
    %1279 = vmatprep.subr.mxu0 0.0
    %1280 = vmatpush1.msra.mxu0 0.0
    %1281 = vmatprep.subr.mxu0 0.0
    %1282 = vmatpush1.msra.mxu0 0.0
    %1283 = vmatprep.subr.mxu0 0.0
    %1284 = vmatpush1.msra.mxu0 0.0
    %1285 = vmatprep.subr.mxu0 0.0
    %1286 = vmatpush1.msra.mxu0 0.0
    %1287 = vmatprep.subr.mxu0 0.0
    %1288 = vmatpush1.msra.mxu0 0.0
    %1289 = vmatprep.subr.mxu0 0.0
    %1290 = vmatpush1.msra.mxu0 0.0
    %1291 = vmatprep.subr.mxu0 0.0
    %1292 = vmatpush1.msra.mxu0 %v59
    %1293 = vmatprep.subr.mxu0 0.0
    %1294 = vmatpush1.msra.mxu0 %v58
    %1295 = vmatprep.subr.mxu0 0.0
    %1296 = vmatpush2.msra.mxu0 0.0
    %1297 = vmatprep.subr.mxu0 0.0
    %1298 = vmatpush2.msra.mxu0 0.0
    %1299 = vmatprep.subr.mxu0 0.0
    %1300 = vmatpush2.msra.mxu0 0.0
    %1301 = vmatprep.subr.mxu0 0.0
    %1302 = vmatpush2.msra.mxu0 0.0
    %1303 = vmatprep.subr.mxu0 0.0
    %1304 = vmatpush2.msra.mxu0 0.0
    %1305 = vmatprep.subr.mxu0 0.0
    %1306 = vmatpush2.msra.mxu0 0.0
    %1307 = vmatprep.subr.mxu0 0.0
    %1308 = vmatpush2.msra.mxu0 0.0
    %1309 = vmatprep.subr.mxu0 0.0
    %1310 = vmatpush2.msra.mxu0 0.0
    %1311 = vmatprep.subr.mxu0 0.0
    %1312 = vmatpush2.msra.mxu0 0.0
    %1313 = vmatprep.subr.mxu0 0.0
    %1314 = vmatpush2.msra.mxu0 0.0
    %1315 = vmatprep.subr.mxu0 0.0
    %1316 = vmatpush2.msra.mxu0 0.0
    %1317 = vmatprep.subr.mxu0 0.0
    %1318 = vmatpush2.msra.mxu0 0.0
    %1319 = vmatprep.subr.mxu0 0.0
    %1320 = vmatpush2.msra.mxu0 0.0
    %1321 = vmatprep.subr.mxu0 0.0
    %1322 = vmatpush2.msra.mxu0 0.0
    %1323 = vmatprep.subr.mxu0 0.0
    %1324 = vmatpush2.msra.mxu0 0.0
    %1325 = vmatprep.subr.mxu0 0.0
    %1326 = vmatpush2.msra.mxu0 0.0
    %1327 = vmatprep.mubr.f32.mxu0 0.0
    %1328 = vmatmul.mubr.f32.gmra.mxu0 %v1258
    %v1329 = vpop.f32.mrf.mxu0
    %v1330 = vadd.f32 0.0, %v1329
    %v1331 = vpop.f32.mrf.mxu0
    %1332 = vmatprep.mubr.f32.mxu0 0.0
    %1333 = vmatmul.mubr.f32.gmra.mxu0 %v1261
    %v1334 = vpop.f32.mrf.mxu0
    %v1335 = vadd.f32 0.0, %v1334
    %v1336 = vpop.f32.mrf.mxu0
    %1337 = vdwg.mxu0
    %1340 = vrot.lane.b32.xlu0 %v376, 16
    %v1341 = vpop.permute.xlu0 %1340
    %1342 = vrot.lane.b32.xlu0 %v381, 16
    %v1343 = vpop.permute.xlu0 %1342
    %1348 = vrot.lane.b32.xlu0 %v535, 32
    %v1349 = vpop.permute.xlu0 %1348
    %1350 = vrot.lane.b32.xlu0 %v540, 32
    %v1351 = vpop.permute.xlu0 %1350
    %1356 = vrot.lane.b32.xlu0 %v694, 48
    %v1357 = vpop.permute.xlu0 %1356
    %1358 = vrot.lane.b32.xlu0 %v699, 48
    %v1359 = vpop.permute.xlu0 %1358
    %1364 = vrot.lane.b32.xlu0 %v853, 64
    %v1365 = vpop.permute.xlu0 %1364
    %1366 = vrot.lane.b32.xlu0 %v858, 64
    %v1367 = vpop.permute.xlu0 %1366
    %1372 = vrot.lane.b32.xlu0 %v1012, 80
    %v1373 = vpop.permute.xlu0 %1372
    %1374 = vrot.lane.b32.xlu0 %v1017, 80
    %v1375 = vpop.permute.xlu0 %1374
    %1380 = vrot.lane.b32.xlu0 %v1171, 96
    %v1381 = vpop.permute.xlu0 %1380
    %1382 = vrot.lane.b32.xlu0 %v1176, 96
    %v1383 = vpop.permute.xlu0 %1382
    %1388 = vrot.lane.b32.xlu0 %v1330, 112
    %v1389 = vpop.permute.xlu0 %1388
    %1390 = vrot.lane.b32.xlu0 %v1335, 112
    %v1391 = vpop.permute.xlu0 %1390
    %v1394 = vsel %vm62, %v217, %v1341
    %v1395 = vsel %vm62, %v222, %v1343
    %vm1396 = vcmask 261120
    %v1397 = vsel %vm1396, %v1394, %v1349
    %v1398 = vsel %vm1396, %v1395, %v1351
    %vm1399 = vcmask 392192
    %v1400 = vsel %vm1399, %v1397, %v1357
    %v1401 = vsel %vm1399, %v1398, %v1359
    %vm1402 = vcmask 523264
    %v1403 = vsel %vm1402, %v1400, %v1365
    %v1404 = vsel %vm1402, %v1401, %v1367
    %vm1405 = vcmask 654336
    %v1406 = vsel %vm1405, %v1403, %v1373
    %v1407 = vsel %vm1405, %v1404, %v1375
    %vm1408 = vcmask 785408
    %v1409 = vsel %vm1408, %v1406, %v1381
    %v1410 = vsel %vm1408, %v1407, %v1383
    %vm1411 = vcmask 916480
    %v1412 = vsel %vm1411, %v1409, %v1389
    %v1413 = vsel %vm1411, %v1410, %v1391
    %1414 = vst [vmem:[#allocation8] sm:$0xff] %v1412
    %1415 = vst [vmem:[#allocation8 + $0x8] sm:$0xff] %v1413
    // Predicated region
    $region26: #{tpu_custom_call.1} parent=1 // pred_check
      _
    $region27: #{tpu_custom_call.1} parent=1 // pred_check_branch
      %1417 = sbr.rel (0) target = $region29
    $region28: #{tpu_custom_call.1} parent=1 // pred_region
      %s1419 = ssub.s32 256, 256
      %1420 = vsyncadd [#allocation4], %s1419
      %s1421 = sshll.u32 [#allocation8], 4
      %s1422 = int_to_ptr.vmem [resolvable:$true] %s1421
      %1427 = dma.vmem_to_hbm [thread:$0]  %s1422, 256, %s3, [#allocation4], 128, 128, 8
    $region29: #{tpu_custom_call.1} parent=1 // pred_fallthru
      _
    // Predicated region
    $region30: #{tpu_custom_call.1} parent=1 // pred_check
      _
    $region31: #{tpu_custom_call.1} parent=1 // pred_check_branch
      %1429 = sbr.rel (0) target = $region33
    $region32: #{tpu_custom_call.1} parent=1 // pred_region
      %1430 = dma.done [#allocation4], 256
    $region33: #{tpu_custom_call.1} parent=1 // pred_fallthru
      _
    %1431 = vsyncpa [#allocation3], 1
    %1432 = vsyncpa [#allocation6], 1
    %1433 = vsyncpa [#allocation4], 1

</llo_original>
